<compile_context>
chip_gen: v7x
topology: tpu7x:2x2x1
jax: 0.10.0
libtpu: 0.0.40
codegen_flags: <defaults>
</compile_context>

<pallas_src>
import functools

import numpy as np
import jax
import jax.numpy as jnp
from jax.experimental import pallas as pl
from jax.experimental.pallas import tpu as pltpu

_VMEM_LIMIT = 64 * 1024 * 1024  # above v5e's 16MiB scoped default, <= v7x physical


def _cparams(semantics):
    return pltpu.CompilerParams(dimension_semantics=semantics,
                                vmem_limit_bytes=_VMEM_LIMIT)


# ----------------------------------------------------------------------------
# Linear (+ ReLU / Sigmoid), row-tiled, bf16 matmul / f32 accumulate
# ----------------------------------------------------------------------------
def _linear_kernel(x_ref, w_ref, b_ref, o_ref, *, act):
    y = jnp.dot(x_ref[...], w_ref[...], preferred_element_type=jnp.float32)
    y = y + b_ref[...]
    if act == "relu":
        y = jnp.maximum(y, 0.0)
    elif act == "sigmoid":
        y = jax.nn.sigmoid(y)
    o_ref[...] = y.astype(o_ref.dtype)


def linear(x, w, b, act="none", *, tm=256):
    """y = act(x @ w + b); x:(M,K) w:(K,N) b:(N,)"""
    M, K = x.shape
    N = w.shape[1]
    tm = min(tm, M)
    return pl.pallas_call(
        functools.partial(_linear_kernel, act=act),
        out_shape=jax.ShapeDtypeStruct((M, N), jnp.float32),
        grid=(pl.cdiv(M, tm),),
        in_specs=[
            pl.BlockSpec((tm, K), lambda i: (i, 0)),
            pl.BlockSpec((K, N), lambda i: (0, 0)),
            pl.BlockSpec((1, N), lambda i: (0, 0)),
        ],
        out_specs=pl.BlockSpec((tm, N), lambda i: (i, 0)),
        compiler_params=_cparams(("parallel",)),
    )(x.astype(jnp.bfloat16), w.astype(jnp.bfloat16),
      b.reshape(1, N).astype(jnp.float32))


# ----------------------------------------------------------------------------
# GATConv: (1) transform kernel  (2) masked-softmax aggregation kernel
# ----------------------------------------------------------------------------
def _gat_transform_kernel(x_ref, w_ref, asrc_ref, adst_ref,
                          xt_ref, as_ref, ad_ref):
    # x' = x @ W  (bf16 in, f32 accumulate); per-head attention coefficients
    # a_src/a_dst via ONE MXU matmul with block-diagonal (HC, H) matrices.
    xt = jnp.dot(x_ref[...], w_ref[...], preferred_element_type=jnp.float32)
    xt_bf = xt.astype(jnp.bfloat16)
    as_ref[...] = jnp.dot(xt_bf, asrc_ref[...], preferred_element_type=jnp.float32)
    ad_ref[...] = jnp.dot(xt_bf, adst_ref[...], preferred_element_type=jnp.float32)
    xt_ref[...] = xt_bf


def _gat_agg_kernel(adst_ref, asrcT_ref, xt_ref, adj_ref, b_ref, o_ref,
                    *, heads, chead):
    # e[i,j] = LeakyReLU(a_dst[i,h] + a_src[j,h]); masked softmax over j;
    # out_i = relu( att @ x'_h + bias )   (concat over heads)
    adjf = adj_ref[...].astype(jnp.float32)           # (tm, N) mask
    adst = adst_ref[...]                              # (tm, H) f32
    asrcT = asrcT_ref[...]                            # (H, N)  f32
    xt = xt_ref[...]                                  # (N, HC) bf16
    for h in range(heads):
        lo = h * chead
        a_d = adst[:, h:h + 1]                        # (tm, 1)
        a_s = asrcT[h:h + 1, :]                       # (1, N)  (no transpose needed)
        e = a_d + a_s                                 # (tm, N)
        e = jnp.where(e > 0, e, 0.2 * e)              # LeakyReLU(0.2)
        e = jnp.where(adjf > 0, e, -1e9)
        e = e - jnp.max(e, axis=-1, keepdims=True)
        p = jnp.exp(e)
        att = p * pl.reciprocal(jnp.sum(p, axis=-1, keepdims=True), approx=True)
        out_h = jnp.dot(att.astype(jnp.bfloat16), xt[:, lo:lo + chead],
                        preferred_element_type=jnp.float32)
        o_ref[:, lo:lo + chead] = jnp.maximum(out_h + b_ref[:, lo:lo + chead], 0.0)


def gat_conv(x, w_bf, asrc_bd, adst_bd, bias, adj_bf, heads, chead, *, tm=256):
    N, K = x.shape
    HC = heads * chead
    tm = min(tm, N)
    grid = (pl.cdiv(N, tm),)

    xt, a_src, a_dst = pl.pallas_call(
        _gat_transform_kernel,
        out_shape=(jax.ShapeDtypeStruct((N, HC), jnp.bfloat16),
                   jax.ShapeDtypeStruct((N, heads), jnp.float32),
                   jax.ShapeDtypeStruct((N, heads), jnp.float32)),
        grid=grid,
        in_specs=[
            pl.BlockSpec((tm, K), lambda i: (i, 0)),
            pl.BlockSpec((K, HC), lambda i: (0, 0)),
            pl.BlockSpec((HC, heads), lambda i: (0, 0)),
            pl.BlockSpec((HC, heads), lambda i: (0, 0)),
        ],
        out_specs=(pl.BlockSpec((tm, HC), lambda i: (i, 0)),
                   pl.BlockSpec((tm, heads), lambda i: (i, 0)),
                   pl.BlockSpec((tm, heads), lambda i: (i, 0))),
        compiler_params=_cparams(("parallel",)),
    )(x.astype(jnp.bfloat16), w_bf, asrc_bd, adst_bd)

    a_srcT = a_src.T  # tiny (H, N) transpose done in XLA glue, not on the XLU

    out = pl.pallas_call(
        functools.partial(_gat_agg_kernel, heads=heads, chead=chead),
        out_shape=jax.ShapeDtypeStruct((N, HC), jnp.float32),
        grid=grid,
        in_specs=[
            pl.BlockSpec((tm, heads), lambda i: (i, 0)),   # a_dst row tile
            pl.BlockSpec((heads, N), lambda i: (0, 0)),    # a_src (transposed), resident
            pl.BlockSpec((N, HC), lambda i: (0, 0)),       # x' (all nodes), resident
            pl.BlockSpec((tm, N), lambda i: (i, 0)),       # adjacency row tile (bf16 mask)
            pl.BlockSpec((1, HC), lambda i: (0, 0)),       # bias
        ],
        out_specs=pl.BlockSpec((tm, HC), lambda i: (i, 0)),
        compiler_params=_cparams(("parallel",)),
    )(a_dst, a_srcT, xt, adj_bf, bias.reshape(1, HC).astype(jnp.float32))
    return out


# ----------------------------------------------------------------------------
# Fused head: AttentionModule + projection_y + pred_layer (one pallas_call)
# ----------------------------------------------------------------------------
def _head_kernel(xflat_ref, bank_ref, mask_ref, qwT_ref, kwT_ref,
                 pyw_ref, pyb_ref, pr1wx_ref, pr1wy_ref, pr1b_ref,
                 pr2w_ref, pr2b_ref, pred_ref, *, T, S, D, A):
    xflat = xflat_ref[...]                            # (T, L*768) bf16
    bank = bank_ref[...]                              # (T, S, D)  bf16
    # ---- AttentionModule (head_num = 1) ----
    q = jnp.tanh(jnp.dot(xflat, qwT_ref[...],
                         preferred_element_type=jnp.float32))             # (T, A)
    k = jnp.tanh(jnp.dot(bank.reshape(T * S, D), kwT_ref[...],
                         preferred_element_type=jnp.float32)).reshape(T, S, A)
    # score reduction stays on VPU/XLU: only T*S = tiny rows here.
    score = jnp.sum(k * q[:, None, :], axis=-1)                            # (T, S)
    score = jnp.where(mask_ref[...] == 0, -1e8, score)
    score = score - jnp.max(score, axis=-1, keepdims=True)
    p = jnp.exp(score)
    att = p * pl.reciprocal(jnp.sum(p, axis=-1, keepdims=True), approx=True)
    # weighted pooling over the bank as a batched MXU matmul (no (T,S,768) temp)
    emb = jnp.einsum("bqk,bkd->bqd", att[:, None, :].astype(jnp.bfloat16), bank,
                     preferred_element_type=jnp.float32).reshape(T, D)     # (T, D)
    # ---- projection_y : Linear + Sigmoid ----
    y = jax.nn.sigmoid(jnp.dot(emb.astype(jnp.bfloat16), pyw_ref[...],
                               preferred_element_type=jnp.float32) + pyb_ref[...])
    # ---- pred_layer : Linear(concat[xflat, y]) + ReLU + Linear ----
    hid = jnp.dot(xflat, pr1wx_ref[...], preferred_element_type=jnp.float32)
    hid = hid + jnp.dot(y.astype(jnp.bfloat16), pr1wy_ref[...],
                        preferred_element_type=jnp.float32)
    hid = jnp.maximum(hid + pr1b_ref[...], 0.0)
    pred = jnp.dot(hid.astype(jnp.bfloat16), pr2w_ref[...],
                   preferred_element_type=jnp.float32) + pr2b_ref[...]
    pred_ref[...] = pred.astype(pred_ref.dtype)


def head_forward(xflat, bank, mask, p):
    T, LD = xflat.shape
    _, S, D = bank.shape
    A = p["QwT"].shape[1]
    n_class = p["pr2_w"].shape[1]
    return pl.pallas_call(
        functools.partial(_head_kernel, T=T, S=S, D=D, A=A),
        out_shape=jax.ShapeDtypeStruct((T, n_class), jnp.float32),
        grid=(1,),
        in_specs=[
            pl.BlockSpec((T, LD), lambda i: (0, 0)),
            pl.BlockSpec((T, S, D), lambda i: (0, 0, 0)),
            pl.BlockSpec((T, S), lambda i: (0, 0)),
            pl.BlockSpec((LD, A), lambda i: (0, 0)),
            pl.BlockSpec((D, A), lambda i: (0, 0)),
            pl.BlockSpec((D, D), lambda i: (0, 0)),
            pl.BlockSpec((1, D), lambda i: (0, 0)),
            pl.BlockSpec((LD, D), lambda i: (0, 0)),
            pl.BlockSpec((D, D), lambda i: (0, 0)),
            pl.BlockSpec((1, D), lambda i: (0, 0)),
            pl.BlockSpec((D, n_class), lambda i: (0, 0)),
            pl.BlockSpec((1, n_class), lambda i: (0, 0)),
        ],
        out_specs=pl.BlockSpec((T, n_class), lambda i: (0, 0)),
        compiler_params=_cparams(("arbitrary",)),
    )(xflat.astype(jnp.bfloat16), bank.astype(jnp.bfloat16), mask,
      p["QwT"], p["KwT"], p["py_w"], p["py_b"].reshape(1, D),
      p["pr1_wx"], p["pr1_wy"], p["pr1_b"].reshape(1, D),
      p["pr2_w"], p["pr2_b"].reshape(1, n_class))


# ----------------------------------------------------------------------------
# Parameters (deterministic, shapes match the PyTorch module)
# ----------------------------------------------------------------------------
def _xavier(key, shape):
    fan_in, fan_out = shape[0], shape[-1]
    bound = float(np.sqrt(6.0 / (fan_in + fan_out)))
    return jax.random.uniform(key, shape, jnp.float32, -bound, bound)


def _block_diag(att, heads, chead):
    """(H, C) per-head vectors -> block-diagonal (H*C, H) matrix (alpha via one matmul)."""
    m = jnp.zeros((heads * chead, heads), jnp.float32)
    for h in range(heads):
        m = m.at[h * chead:(h + 1) * chead, h].set(att[h])
    return m


def init_params(key, *, x_dim, gdim, heads, num_layers, att_dim, n_class):
    chead = gdim // heads
    keys = jax.random.split(key, 32)
    ki = iter(keys)
    bf = jnp.bfloat16
    p = {}
    # GAT.additional_head : Linear(x_dim, x_dim) + ReLU
    p["ah_w"] = _xavier(next(ki), (x_dim, x_dim)).astype(bf)
    p["ah_b"] = jnp.zeros((x_dim,), jnp.float32)
    # GATConv layers
    p["convs"] = []
    for i in range(num_layers):
        in_dim = x_dim if i == 0 else gdim
        att_src = 0.1 * jax.random.normal(next(ki), (heads, chead), jnp.float32)
        att_dst = 0.1 * jax.random.normal(next(ki), (heads, chead), jnp.float32)
        p["convs"].append({
            "w": _xavier(next(ki), (in_dim, heads * chead)).astype(bf),
            "asrc_bd": _block_diag(att_src, heads, chead).astype(bf),
            "adst_bd": _block_diag(att_dst, heads, chead).astype(bf),
            "b": jnp.zeros((heads * chead,), jnp.float32),
        })
    # GAT.output_layer : Linear(gdim,gdim)+ReLU+Linear(gdim,768)
    p["out1_w"] = _xavier(next(ki), (gdim, gdim)).astype(bf)
    p["out1_b"] = jnp.zeros((gdim,), jnp.float32)
    p["out2_w"] = _xavier(next(ki), (gdim, 768)).astype(bf)
    p["out2_b"] = jnp.zeros((768,), jnp.float32)
    # AttentionModule: Query (1, att_dim, L*768), Key (1, att_dim, 768) -> transposed
    p["QwT"] = _xavier(next(ki), (num_layers * 768, att_dim)).astype(bf)
    p["KwT"] = _xavier(next(ki), (768, att_dim)).astype(bf)
    # projection_y : Linear(x_dim, x_dim) + Sigmoid
    p["py_w"] = _xavier(next(ki), (x_dim, x_dim)).astype(bf)
    p["py_b"] = jnp.zeros((x_dim,), jnp.float32)
    # pred_layer : Linear(x_dim*(L+1), x_dim)+ReLU+Linear(x_dim, n_class)
    # split the first weight so the concat becomes two matmuls (exact block split)
    w1 = _xavier(next(ki), (x_dim * (num_layers + 1), x_dim))
    p["pr1_wx"] = w1[: num_layers * 768].astype(bf)
    p["pr1_wy"] = w1[num_layers * 768:].astype(bf)
    p["pr1_b"] = jnp.zeros((x_dim,), jnp.float32)
    p["pr2_w"] = _xavier(next(ki), (x_dim, n_class)).astype(bf)
    p["pr2_b"] = jnp.zeros((n_class,), jnp.float32)
    return p


# ----------------------------------------------------------------------------
# Forward pass (mirrors NodeClassification.forward, use_graph_des=False,
# use_method='attention', graph_encoder='GAT')
# ----------------------------------------------------------------------------
def node_classification_forward(params, data, *, heads, chead, num_layers):
    x = data["x"]                                   # (N, x_dim)
    N = x.shape[0]
    train_mask = np.asarray(data["train_node_mask"])

    # TODO(synk): the torch randperm subsample branch (train_index > N//10) is
    # data-dependent control flow; the example data keeps it statically skipped.
    train_index = np.arange(train_mask.shape[0])[train_mask]
    tenth = N // 10
    assert not (train_index.shape[0] > tenth and tenth > 0), \
        "example data chosen so the randperm-subsample branch is not taken"
    train_index = jnp.asarray(train_index, jnp.int32)

    # x[train_index] = 0
    x = x.at[train_index].set(0.0)

    # ---- GAT graph encoder ----
    h = linear(x, params["ah_w"], params["ah_b"], act="relu")      # additional_head
    adj = data["adj"]                                              # (N,N) bf16 mask (+self loops)
    xs = []
    for i in range(num_layers):
        c = params["convs"][i]
        h = gat_conv(h, c["w"], c["asrc_bd"], c["adst_bd"], c["b"], adj, heads, chead)
        xs.append(h)
    node_emb_all = jnp.stack(xs, axis=1)                           # (N, L, gdim)
    flat = node_emb_all.reshape(N * num_layers, -1)
    o1 = linear(flat, params["out1_w"], params["out1_b"], act="relu")
    emb = linear(o1, params["out2_w"], params["out2_b"]).reshape(N, num_layers, 768)
    # embeddings_g (global_mean_pool) is computed by the torch encoder but its
    # value is unused by NodeClassification.forward's outputs -> skipped.

    # ---- fused head ----
    node_emb = emb[train_index]                                    # (T, L, 768)
    T = node_emb.shape[0]
    batch_sel = data["batch"][train_index]
    # use_graph_des == False  =>  bank = ones_like(data.y[batch[train_index]])
    bank = jnp.ones_like(data["y"][batch_sel])                     # (T, S, 768)
    mask = data["desmask"][batch_sel]                              # (T, S)
    xflat = node_emb.reshape(T, -1)                                # (T, L*768)
    pred = head_forward(xflat, bank, mask, params)                 # (T, n_class)
    std = data["node_type"][train_index]
    return pred, std


# ----------------------------------------------------------------------------
# Example data + run
# ----------------------------------------------------------------------------
if __name__ == "__main__":
    X_DIM = 768          # implied by the hard-coded 768s in the module
    GDIM = 512           # args.graph_emb_dim
    HEADS = 4            # args.GAT_heads
    NUM_LAYERS = 3       # args.num_layers
    CHEAD = GDIM // HEADS
    ATT_DIM = 128        # AttentionModule out_dim
    N_CLASS = 5          # args.tot_node_class
    N_NODES = 24         # small graph batch: 2 graphs x 12 nodes
    N_GRAPHS = 2
    SEQ = 8              # label-bank sequence length

    key = jax.random.PRNGKey(0)
    kp, kx, ky, kt = jax.random.split(key, 4)
    params = init_params(kp, x_dim=X_DIM, gdim=GDIM, heads=HEADS,
                         num_layers=NUM_LAYERS, att_dim=ATT_DIM, n_class=N_CLASS)

    # node features
    x = jax.random.normal(kx, (N_NODES, X_DIM), jnp.float32)

    # edge_index: bidirectional chain within each graph
    src, dst = [], []
    per = N_NODES // N_GRAPHS
    for g in range(N_GRAPHS):
        base = g * per
        for i in range(per - 1):
            src += [base + i, base + i + 1]
            dst += [base + i + 1, base + i]
    # dense adjacency A[dst, src] = 1, plus self loops (GATConv default);
    # stored as bf16 (mask only) to halve DMA/VMEM vs f32.
    adj_np = np.zeros((N_NODES, N_NODES), np.float32)
    adj_np[np.asarray(dst), np.asarray(src)] = 1.0
    np.fill_diagonal(adj_np, 1.0)

    batch = np.repeat(np.arange(N_GRAPHS), per).astype(np.int32)

    # 2 train nodes; N//10 == 2, so the randperm-subsample branch is not taken
    train_mask = np.zeros((N_NODES,), bool)
    train_mask[2] = True
    train_mask[15] = True

    y_bank = jax.random.normal(ky, (N_GRAPHS, SEQ, 768), jnp.float32)
    desmask = np.ones((N_GRAPHS, SEQ), np.int32)
    desmask[0, 5:] = 0
    node_type = np.asarray(
        jax.random.randint(kt, (N_NODES,), 0, N_CLASS), np.int32)

    data = {
        "x": x,
        "adj": jnp.asarray(adj_np, jnp.bfloat16),
        "batch": jnp.asarray(batch),
        "train_node_mask": train_mask,
        "y": y_bank,
        "desmask": jnp.asarray(desmask),
        "node_type": jnp.asarray(node_type),
    }

    pred, std = node_classification_forward(
        params, data, heads=HEADS, chead=CHEAD, num_layers=NUM_LAYERS)
    jax.block_until_ready(pred)
    jax.block_until_ready(std)
    assert pred.shape == (2, N_CLASS) and std.shape == (2,)
    assert bool(jnp.all(jnp.isfinite(pred)))
    print("KERNEL_OK")
</pallas_src>

<mosaic_0001>
module attributes {stable_mosaic.version = 11 : i64} {
  func.func @_linear_kernel(%arg0: i32, %arg1: memref<24x768xbf16, #tpu.memory_space<vmem>>, %arg2: memref<768x768xbf16, #tpu.memory_space<vmem>>, %arg3: memref<1x768xf32, #tpu.memory_space<vmem>>, %arg4: memref<24x768xf32, #tpu.memory_space<vmem>>) attributes {dimension_semantics = [#tpu.dimension_semantics<parallel>], iteration_bounds = array<i64: 1>, scalar_prefetch = 0 : i64, scratch_operands = 0 : i64, tpu.core_type = #tpu.core_type<tc>, window_params = [{transform_indices = @transform_0, window_bounds = array<i64: 24, 768>}, {pipeline_mode = #tpu.pipeline_mode<synchronous>, transform_indices = @transform_1, window_bounds = array<i64: 768, 768>}, {pipeline_mode = #tpu.pipeline_mode<synchronous>, transform_indices = @transform_2, window_bounds = array<i64: 1, 768>}, {transform_indices = @transform_3, window_bounds = array<i64: 24, 768>}]} {
    %c0 = arith.constant 0 : index
    %c0_0 = arith.constant 0 : index
    %0 = vector.load %arg1[%c0, %c0_0] : memref<24x768xbf16, #tpu.memory_space<vmem>>, vector<24x768xbf16>
    %c0_1 = arith.constant 0 : index
    %c0_2 = arith.constant 0 : index
    %1 = vector.load %arg2[%c0_1, %c0_2] : memref<768x768xbf16, #tpu.memory_space<vmem>>, vector<768x768xbf16>
    %cst = arith.constant dense<0.000000e+00> : vector<24x768xf32>
    %2 = tpu.matmul %0, %1, %cst {dimension_numbers = #tpu.dot_dimension_numbers<[1], [0], [0], [1], [0, 0, 1, 1], [], []>} : vector<24x768xbf16>, vector<768x768xbf16>, vector<24x768xf32> -> vector<24x768xf32>
    %c0_3 = arith.constant 0 : index
    %c0_4 = arith.constant 0 : index
    %3 = vector.load %arg3[%c0_3, %c0_4] : memref<1x768xf32, #tpu.memory_space<vmem>>, vector<1x768xf32>
    %4 = vector.broadcast %3 : vector<1x768xf32> to vector<24x768xf32>
    %5 = arith.addf %2, %4 : vector<24x768xf32>
    %cst_5 = arith.constant 0.000000e+00 : f32
    %6 = vector.broadcast %cst_5 : f32 to vector<24x768xf32>
    %7 = arith.maximumf %5, %6 : vector<24x768xf32>
    %c0_6 = arith.constant 0 : index
    %c0_7 = arith.constant 0 : index
    %8 = vector.load %arg4[%c0_6, %c0_7] : memref<24x768xf32, #tpu.memory_space<vmem>>, vector<24x768xf32>
    tpu.vector_store %arg4[%c0_6, %c0_7], %7 {strides = array<i32>} : memref<24x768xf32, #tpu.memory_space<vmem>>, vector<24x768xf32>,
    return
  }
  func.func @transform_0(%arg0: i32) -> (i32, i32) {
    %c0_i32 = arith.constant 0 : i32
    %c0_i32_0 = arith.constant 0 : i32
    return %arg0, %c0_i32 : i32, i32
  }
  func.func @transform_1(%arg0: i32) -> (i32, i32) {
    %c0_i32 = arith.constant 0 : i32
    %c0_i32_0 = arith.constant 0 : i32
    %c0_i32_1 = arith.constant 0 : i32
    return %c0_i32, %c0_i32_0 : i32, i32
  }
  func.func @transform_2(%arg0: i32) -> (i32, i32) {
    %c0_i32 = arith.constant 0 : i32
    %c0_i32_0 = arith.constant 0 : i32
    %c0_i32_1 = arith.constant 0 : i32
    return %c0_i32, %c0_i32_0 : i32, i32
  }
  func.func @transform_3(%arg0: i32) -> (i32, i32) {
    %c0_i32 = arith.constant 0 : i32
    %c0_i32_0 = arith.constant 0 : i32
    return %arg0, %c0_i32 : i32, i32
  }
}

</mosaic_0001>

<llo_original>
// kernel: tpu_custom_call.1
$region0: #{tpu_custom_call.1}
  #allocation0 [shape = 'u32[]', space=smem, size = 0x4, offset = 0x4, fixed_abs, tag = 'smem constant byte address 0x4 - core index']
  #allocation1 [shape = 'u32[144,128]{1,0:T(1,128)}', space=vmem, size = 0x12000, scoped, tag = 'internal scratch']
  %s0 = inlined_call_operand.hbm [shape: bf16[24,768], index: 0, kind: input, shape index: {}]
  %s1 = inlined_call_operand.hbm [shape: bf16[768,768], index: 1, kind: input, shape index: {}]
  %s2 = inlined_call_operand.hbm [shape: f32[1,768], index: 2, kind: input, shape index: {}]
  %s3 = inlined_call_operand.hbm [shape: f32[24,768], index: 3, kind: output, shape index: {}]
  %s4 = sld [smem:[#allocation0]]
  $region34: #{tpu_custom_call.1} parent=0
    _
  %s6 = ssub.s32 1, %s4
  %s7 = scalar_select 0, %s6, %s4
  $region1: #{tpu_custom_call.1} parent=0
    #allocation2 [shape = 'u8[36864]{0}', space=vmem, size = 0x9000, scoped, tag = 'input window, operand 0, single buffered']
    #allocation3 [shape = 's32[1]{0}', space=sflag, size = 0x4, scoped, tag = 'scoped memory for tpu_custom_call.1']
    #allocation4 [shape = 's32[1]{0}', space=sflag, size = 0x4, scoped, tag = 'scoped memory for tpu_custom_call.1']
    #allocation5 [shape = 'u8[1179648]{0}', space=vmem, size = 0x120000, scoped, tag = 'input window, operand 1, single buffered']
    #allocation6 [shape = 's32[1]{0}', space=sflag, size = 0x4, scoped, tag = 'scoped memory for tpu_custom_call.1']
    #allocation7 [shape = 'u8[3072]{0}', space=vmem, size = 0xc00, scoped, tag = 'input window, operand 2, single buffered']
    #allocation8 [shape = 'u8[73728]{0}', space=vmem, size = 0x12000, scoped, tag = 'output window, operand 0, single buffered']
    %8 = vsyncpa [#allocation3], 0
    %9 = vsyncpa [#allocation6], 0
    %10 = vsyncpa [#allocation4], 0
    // Predicated region
    $region2: #{tpu_custom_call.1} parent=1 // pred_check
      _
    $region3: #{tpu_custom_call.1} parent=1 // pred_check_branch
      %12 = sbr.rel (0) target = $region5
    $region4: #{tpu_custom_call.1} parent=1 // pred_region
      %s14 = ssub.s32 1152, 1152
      %15 = vsyncadd [#allocation3], %s14
      %s16 = sshll.u32 [#allocation2], 4
      %s17 = int_to_ptr.vmem [resolvable:$true] %s16
      %22 = dma.hbm_to_vmem [thread:$0]  %s0, 1152, %s17, [#allocation3], 384, 384, 24
    $region5: #{tpu_custom_call.1} parent=1 // pred_fallthru
      _
    // Predicated region
    $region6: #{tpu_custom_call.1} parent=1 // pred_check
      _
    $region7: #{tpu_custom_call.1} parent=1 // pred_check_branch
      %24 = sbr.rel (0) target = $region9
    $region8: #{tpu_custom_call.1} parent=1 // pred_region
      %s26 = ssub.s32 36864, 36864
      %27 = vsyncadd [#allocation6], %s26
      %s28 = sshll.u32 [#allocation5], 4
      %s29 = int_to_ptr.vmem [resolvable:$true] %s28
      %34 = dma.hbm_to_vmem [thread:$0]  %s1, 36864, %s29, [#allocation6], 384, 384, 24
    $region9: #{tpu_custom_call.1} parent=1 // pred_fallthru
      _
    // Predicated region
    $region10: #{tpu_custom_call.1} parent=1 // pred_check
      _
    $region11: #{tpu_custom_call.1} parent=1 // pred_check_branch
      %36 = sbr.rel (0) target = $region13
    $region12: #{tpu_custom_call.1} parent=1 // pred_region
      %s38 = ssub.s32 96, 96
      %39 = vsyncadd [#allocation6], %s38
      %s41 = sshll.u32 [#allocation7], 4
      %s42 = int_to_ptr.vmem [resolvable:$true] %s41
      %44 = dma.hbm_to_vmem [thread:$0]  %s2, 96, %s42, [#allocation6]
    $region13: #{tpu_custom_call.1} parent=1 // pred_fallthru
      _
    // Predicated region
    $region14: #{tpu_custom_call.1} parent=1 // pred_check
      _
    $region15: #{tpu_custom_call.1} parent=1 // pred_check_branch
      %46 = sbr.rel (0) target = $region17
    $region16: #{tpu_custom_call.1} parent=1 // pred_region
      %47 = dma.done [#allocation3], 1152
    $region17: #{tpu_custom_call.1} parent=1 // pred_fallthru
      _
    // Predicated region
    $region18: #{tpu_custom_call.1} parent=1 // pred_check
      _
    $region19: #{tpu_custom_call.1} parent=1 // pred_check_branch
      %49 = sbr.rel (0) target = $region21
    $region20: #{tpu_custom_call.1} parent=1 // pred_region
      %50 = dma.done [#allocation6], 36864
    $region21: #{tpu_custom_call.1} parent=1 // pred_fallthru
      _
    // Predicated region
    $region22: #{tpu_custom_call.1} parent=1 // pred_check
      _
    $region23: #{tpu_custom_call.1} parent=1 // pred_check_branch
      %52 = sbr.rel (0) target = $region25
    $region24: #{tpu_custom_call.1} parent=1 // pred_region
      %53 = dma.done [#allocation6], 96
    $region25: #{tpu_custom_call.1} parent=1 // pred_fallthru
      _
    %v54 = vld [vmem:[#allocation2] sm:$0xff]
    %v55 = vld [vmem:[#allocation2 + $0x8] sm:$0xff]
    %v56 = vld [vmem:[#allocation2 + $0x10] sm:$0xff]
    %v57 = vld [vmem:[#allocation2 + $0x18] sm:$0xff]
    %v58 = vld [vmem:[#allocation2 + $0x20] sm:$0xff]
    %v59 = vld [vmem:[#allocation2 + $0x28] sm:$0xff]
    %v60 = vld [vmem:[#allocation2 + $0x30] sm:$0xff]
    %v61 = vld [vmem:[#allocation2 + $0x38] sm:$0xff]
    %v62 = vld [vmem:[#allocation2 + $0x40] sm:$0xff]
    %v63 = vld [vmem:[#allocation5] sm:$0xff]
    %v64 = vld [vmem:[#allocation5 + $0x8] sm:$0xff]
    %v65 = vld [vmem:[#allocation5 + $0x10] sm:$0xff]
    %v66 = vld [vmem:[#allocation5 + $0x18] sm:$0xff]
    %v67 = vld [vmem:[#allocation5 + $0x20] sm:$0xff]
    %v68 = vld [vmem:[#allocation5 + $0x28] sm:$0xff]
    %v69 = vld [vmem:[#allocation5 + $0x30] sm:$0xff]
    %v70 = vld [vmem:[#allocation5 + $0x38] sm:$0xff]
    %v71 = vld [vmem:[#allocation5 + $0x40] sm:$0xff]
    %v72 = vld [vmem:[#allocation5 + $0x48] sm:$0xff]
    %v73 = vld [vmem:[#allocation5 + $0x50] sm:$0xff]
    %v74 = vld [vmem:[#allocation5 + $0x58] sm:$0xff]
    %v75 = vld [vmem:[#allocation5 + $0x60] sm:$0xff]
    %v76 = vld [vmem:[#allocation5 + $0x68] sm:$0xff]
    %v77 = vld [vmem:[#allocation5 + $0x70] sm:$0xff]
    %v78 = vld [vmem:[#allocation5 + $0x78] sm:$0xff]
    %v79 = vld [vmem:[#allocation5 + $0x80] sm:$0xff]
    %v80 = vld [vmem:[#allocation5 + $0x88] sm:$0xff]
    %v81 = vld [vmem:[#allocation5 + $0x90] sm:$0xff]
    %v82 = vld [vmem:[#allocation5 + $0x98] sm:$0xff]
    %v83 = vld [vmem:[#allocation5 + $0xa0] sm:$0xff]
    %v84 = vld [vmem:[#allocation5 + $0xa8] sm:$0xff]
    %v85 = vld [vmem:[#allocation5 + $0xb0] sm:$0xff]
    %v86 = vld [vmem:[#allocation5 + $0xb8] sm:$0xff]
    %v87 = vld [vmem:[#allocation5 + $0xc0] sm:$0xff]
    %v88 = vld [vmem:[#allocation5 + $0xc8] sm:$0xff]
    %v89 = vld [vmem:[#allocation5 + $0xd0] sm:$0xff]
    %v90 = vld [vmem:[#allocation5 + $0xd8] sm:$0xff]
    %v91 = vld [vmem:[#allocation5 + $0xe0] sm:$0xff]
    %v92 = vld [vmem:[#allocation5 + $0xe8] sm:$0xff]
    %v93 = vld [vmem:[#allocation5 + $0xf0] sm:$0xff]
    %v94 = vld [vmem:[#allocation5 + $0xf8] sm:$0xff]
    %v95 = vld [vmem:[#allocation5 + $0x100] sm:$0xff]
    %v96 = vld [vmem:[#allocation5 + $0x108] sm:$0xff]
    %v97 = vld [vmem:[#allocation5 + $0x110] sm:$0xff]
    %v98 = vld [vmem:[#allocation5 + $0x118] sm:$0xff]
    %v99 = vld [vmem:[#allocation5 + $0x120] sm:$0xff]
    %v100 = vld [vmem:[#allocation5 + $0x128] sm:$0xff]
    %v101 = vld [vmem:[#allocation5 + $0x130] sm:$0xff]
    %v102 = vld [vmem:[#allocation5 + $0x138] sm:$0xff]
    %v103 = vld [vmem:[#allocation5 + $0x140] sm:$0xff]
    %v104 = vld [vmem:[#allocation5 + $0x148] sm:$0xff]
    %v105 = vld [vmem:[#allocation5 + $0x150] sm:$0xff]
    %v106 = vld [vmem:[#allocation5 + $0x158] sm:$0xff]
    %v107 = vld [vmem:[#allocation5 + $0x160] sm:$0xff]
    %v108 = vld [vmem:[#allocation5 + $0x168] sm:$0xff]
    %v109 = vld [vmem:[#allocation5 + $0x170] sm:$0xff]
    %v110 = vld [vmem:[#allocation5 + $0x178] sm:$0xff]
    %v111 = vld [vmem:[#allocation5 + $0x180] sm:$0xff]
    %v112 = vld [vmem:[#allocation5 + $0x188] sm:$0xff]
    %v113 = vld [vmem:[#allocation5 + $0x190] sm:$0xff]
    %v114 = vld [vmem:[#allocation5 + $0x198] sm:$0xff]
    %v115 = vld [vmem:[#allocation5 + $0x1a0] sm:$0xff]
    %v116 = vld [vmem:[#allocation5 + $0x1a8] sm:$0xff]
    %v117 = vld [vmem:[#allocation5 + $0x1b0] sm:$0xff]
    %v118 = vld [vmem:[#allocation5 + $0x1b8] sm:$0xff]
    %v119 = vld [vmem:[#allocation5 + $0x1c0] sm:$0xff]
    %v120 = vld [vmem:[#allocation5 + $0x1c8] sm:$0xff]
    %v121 = vld [vmem:[#allocation5 + $0x1d0] sm:$0xff]
    %v122 = vld [vmem:[#allocation5 + $0x1d8] sm:$0xff]
    %v123 = vld [vmem:[#allocation5 + $0x1e0] sm:$0xff]
    %v124 = vld [vmem:[#allocation5 + $0x1e8] sm:$0xff]
    %v125 = vld [vmem:[#allocation5 + $0x1f0] sm:$0xff]
    %v126 = vld [vmem:[#allocation5 + $0x1f8] sm:$0xff]
    %v127 = vld [vmem:[#allocation5 + $0x200] sm:$0xff]
    %v128 = vld [vmem:[#allocation5 + $0x208] sm:$0xff]
    %v129 = vld [vmem:[#allocation5 + $0x210] sm:$0xff]
    %v130 = vld [vmem:[#allocation5 + $0x218] sm:$0xff]
    %v131 = vld [vmem:[#allocation5 + $0x220] sm:$0xff]
    %v132 = vld [vmem:[#allocation5 + $0x228] sm:$0xff]
    %v133 = vld [vmem:[#allocation5 + $0x230] sm:$0xff]
    %v134 = vld [vmem:[#allocation5 + $0x238] sm:$0xff]
    %v135 = vld [vmem:[#allocation5 + $0x240] sm:$0xff]
    %v136 = vld [vmem:[#allocation5 + $0x248] sm:$0xff]
    %v137 = vld [vmem:[#allocation5 + $0x250] sm:$0xff]
    %v138 = vld [vmem:[#allocation5 + $0x258] sm:$0xff]
    %v139 = vld [vmem:[#allocation5 + $0x260] sm:$0xff]
    %v140 = vld [vmem:[#allocation5 + $0x268] sm:$0xff]
    %v141 = vld [vmem:[#allocation5 + $0x270] sm:$0xff]
    %v142 = vld [vmem:[#allocation5 + $0x278] sm:$0xff]
    %v143 = vld [vmem:[#allocation5 + $0x280] sm:$0xff]
    %v144 = vld [vmem:[#allocation5 + $0x288] sm:$0xff]
    %v145 = vld [vmem:[#allocation5 + $0x290] sm:$0xff]
    %v146 = vld [vmem:[#allocation5 + $0x298] sm:$0xff]
    %v147 = vld [vmem:[#allocation5 + $0x2a0] sm:$0xff]
    %v148 = vld [vmem:[#allocation5 + $0x2a8] sm:$0xff]
    %v149 = vld [vmem:[#allocation5 + $0x2b0] sm:$0xff]
    %v150 = vld [vmem:[#allocation5 + $0x2b8] sm:$0xff]
    %v151 = vld [vmem:[#allocation5 + $0x2c0] sm:$0xff]
    %v152 = vld [vmem:[#allocation5 + $0x2c8] sm:$0xff]
    %v153 = vld [vmem:[#allocation5 + $0x2d0] sm:$0xff]
    %v154 = vld [vmem:[#allocation5 + $0x2d8] sm:$0xff]
    %v155 = vld [vmem:[#allocation5 + $0x2e0] sm:$0xff]
    %v156 = vld [vmem:[#allocation5 + $0x2e8] sm:$0xff]
    %v157 = vld [vmem:[#allocation5 + $0x2f0] sm:$0xff]
    %v158 = vld [vmem:[#allocation5 + $0x2f8] sm:$0xff]
    %v159 = vld [vmem:[#allocation5 + $0x300] sm:$0xff]
    %v160 = vld [vmem:[#allocation5 + $0x308] sm:$0xff]
    %v161 = vld [vmem:[#allocation5 + $0x310] sm:$0xff]
    %v162 = vld [vmem:[#allocation5 + $0x318] sm:$0xff]
    %v163 = vld [vmem:[#allocation5 + $0x320] sm:$0xff]
    %v164 = vld [vmem:[#allocation5 + $0x328] sm:$0xff]
    %v165 = vld [vmem:[#allocation5 + $0x330] sm:$0xff]
    %v166 = vld [vmem:[#allocation5 + $0x338] sm:$0xff]
    %v167 = vld [vmem:[#allocation5 + $0x340] sm:$0xff]
    %v168 = vld [vmem:[#allocation5 + $0x348] sm:$0xff]
    %v169 = vld [vmem:[#allocation5 + $0x350] sm:$0xff]
    %v170 = vld [vmem:[#allocation5 + $0x358] sm:$0xff]
    %v171 = vld [vmem:[#allocation5 + $0x360] sm:$0xff]
    %v172 = vld [vmem:[#allocation5 + $0x368] sm:$0xff]
    %v173 = vld [vmem:[#allocation5 + $0x370] sm:$0xff]
    %v174 = vld [vmem:[#allocation5 + $0x378] sm:$0xff]
    %v175 = vld [vmem:[#allocation5 + $0x380] sm:$0xff]
    %v176 = vld [vmem:[#allocation5 + $0x388] sm:$0xff]
    %v177 = vld [vmem:[#allocation5 + $0x390] sm:$0xff]
    %v178 = vld [vmem:[#allocation5 + $0x398] sm:$0xff]
    %v179 = vld [vmem:[#allocation5 + $0x3a0] sm:$0xff]
    %v180 = vld [vmem:[#allocation5 + $0x3a8] sm:$0xff]
    %v181 = vld [vmem:[#allocation5 + $0x3b0] sm:$0xff]
    %v182 = vld [vmem:[#allocation5 + $0x3b8] sm:$0xff]
    %v183 = vld [vmem:[#allocation5 + $0x3c0] sm:$0xff]
    %v184 = vld [vmem:[#allocation5 + $0x3c8] sm:$0xff]
    %v185 = vld [vmem:[#allocation5 + $0x3d0] sm:$0xff]
    %v186 = vld [vmem:[#allocation5 + $0x3d8] sm:$0xff]
    %v187 = vld [vmem:[#allocation5 + $0x3e0] sm:$0xff]
    %v188 = vld [vmem:[#allocation5 + $0x3e8] sm:$0xff]
    %v189 = vld [vmem:[#allocation5 + $0x3f0] sm:$0xff]
    %v190 = vld [vmem:[#allocation5 + $0x3f8] sm:$0xff]
    %v191 = vld [vmem:[#allocation5 + $0x400] sm:$0xff]
    %v192 = vld [vmem:[#allocation5 + $0x408] sm:$0xff]
    %v193 = vld [vmem:[#allocation5 + $0x410] sm:$0xff]
    %v194 = vld [vmem:[#allocation5 + $0x418] sm:$0xff]
    %v195 = vld [vmem:[#allocation5 + $0x420] sm:$0xff]
    %v196 = vld [vmem:[#allocation5 + $0x428] sm:$0xff]
    %v197 = vld [vmem:[#allocation5 + $0x430] sm:$0xff]
    %v198 = vld [vmem:[#allocation5 + $0x438] sm:$0xff]
    %v199 = vld [vmem:[#allocation5 + $0x440] sm:$0xff]
    %v200 = vld [vmem:[#allocation5 + $0x448] sm:$0xff]
    %v201 = vld [vmem:[#allocation5 + $0x450] sm:$0xff]
    %v202 = vld [vmem:[#allocation5 + $0x458] sm:$0xff]
    %v203 = vld [vmem:[#allocation5 + $0x460] sm:$0xff]
    %v204 = vld [vmem:[#allocation5 + $0x468] sm:$0xff]
    %v205 = vld [vmem:[#allocation5 + $0x470] sm:$0xff]
    %v206 = vld [vmem:[#allocation5 + $0x478] sm:$0xff]
    %v207 = vld [vmem:[#allocation5 + $0x480] sm:$0xff]
    %v208 = vld [vmem:[#allocation5 + $0x488] sm:$0xff]
    %v209 = vld [vmem:[#allocation5 + $0x490] sm:$0xff]
    %v210 = vld [vmem:[#allocation5 + $0x498] sm:$0xff]
    %v211 = vld [vmem:[#allocation5 + $0x4a0] sm:$0xff]
    %v212 = vld [vmem:[#allocation5 + $0x4a8] sm:$0xff]
    %v213 = vld [vmem:[#allocation5 + $0x4b0] sm:$0xff]
    %v214 = vld [vmem:[#allocation5 + $0x4b8] sm:$0xff]
    %v215 = vld [vmem:[#allocation5 + $0x4c0] sm:$0xff]
    %v216 = vld [vmem:[#allocation5 + $0x4c8] sm:$0xff]
    %v217 = vld [vmem:[#allocation5 + $0x4d0] sm:$0xff]
    %v218 = vld [vmem:[#allocation5 + $0x4d8] sm:$0xff]
    %v219 = vld [vmem:[#allocation5 + $0x4e0] sm:$0xff]
    %v220 = vld [vmem:[#allocation5 + $0x4e8] sm:$0xff]
    %v221 = vld [vmem:[#allocation5 + $0x4f0] sm:$0xff]
    %v222 = vld [vmem:[#allocation5 + $0x4f8] sm:$0xff]
    %v223 = vld [vmem:[#allocation5 + $0x500] sm:$0xff]
    %v224 = vld [vmem:[#allocation5 + $0x508] sm:$0xff]
    %v225 = vld [vmem:[#allocation5 + $0x510] sm:$0xff]
    %v226 = vld [vmem:[#allocation5 + $0x518] sm:$0xff]
    %v227 = vld [vmem:[#allocation5 + $0x520] sm:$0xff]
    %v228 = vld [vmem:[#allocation5 + $0x528] sm:$0xff]
    %v229 = vld [vmem:[#allocation5 + $0x530] sm:$0xff]
    %v230 = vld [vmem:[#allocation5 + $0x538] sm:$0xff]
    %v231 = vld [vmem:[#allocation5 + $0x540] sm:$0xff]
    %v232 = vld [vmem:[#allocation5 + $0x548] sm:$0xff]
    %v233 = vld [vmem:[#allocation5 + $0x550] sm:$0xff]
    %v234 = vld [vmem:[#allocation5 + $0x558] sm:$0xff]
    %v235 = vld [vmem:[#allocation5 + $0x560] sm:$0xff]
    %v236 = vld [vmem:[#allocation5 + $0x568] sm:$0xff]
    %v237 = vld [vmem:[#allocation5 + $0x570] sm:$0xff]
    %v238 = vld [vmem:[#allocation5 + $0x578] sm:$0xff]
    %v239 = vld [vmem:[#allocation5 + $0x580] sm:$0xff]
    %v240 = vld [vmem:[#allocation5 + $0x588] sm:$0xff]
    %v241 = vld [vmem:[#allocation5 + $0x590] sm:$0xff]
    %v242 = vld [vmem:[#allocation5 + $0x598] sm:$0xff]
    %v243 = vld [vmem:[#allocation5 + $0x5a0] sm:$0xff]
    %v244 = vld [vmem:[#allocation5 + $0x5a8] sm:$0xff]
    %v245 = vld [vmem:[#allocation5 + $0x5b0] sm:$0xff]
    %v246 = vld [vmem:[#allocation5 + $0x5b8] sm:$0xff]
    %v247 = vld [vmem:[#allocation5 + $0x5c0] sm:$0xff]
    %v248 = vld [vmem:[#allocation5 + $0x5c8] sm:$0xff]
    %v249 = vld [vmem:[#allocation5 + $0x5d0] sm:$0xff]
    %v250 = vld [vmem:[#allocation5 + $0x5d8] sm:$0xff]
    %v251 = vld [vmem:[#allocation5 + $0x5e0] sm:$0xff]
    %v252 = vld [vmem:[#allocation5 + $0x5e8] sm:$0xff]
    %v253 = vld [vmem:[#allocation5 + $0x5f0] sm:$0xff]
    %v254 = vld [vmem:[#allocation5 + $0x5f8] sm:$0xff]
    %v255 = vld [vmem:[#allocation5 + $0x600] sm:$0xff]
    %v256 = vld [vmem:[#allocation5 + $0x608] sm:$0xff]
    %v257 = vld [vmem:[#allocation5 + $0x610] sm:$0xff]
    %v258 = vld [vmem:[#allocation5 + $0x618] sm:$0xff]
    %v259 = vld [vmem:[#allocation5 + $0x620] sm:$0xff]
    %v260 = vld [vmem:[#allocation5 + $0x628] sm:$0xff]
    %v261 = vld [vmem:[#allocation5 + $0x630] sm:$0xff]
    %v262 = vld [vmem:[#allocation5 + $0x638] sm:$0xff]
    %v263 = vld [vmem:[#allocation5 + $0x640] sm:$0xff]
    %v264 = vld [vmem:[#allocation5 + $0x648] sm:$0xff]
    %v265 = vld [vmem:[#allocation5 + $0x650] sm:$0xff]
    %v266 = vld [vmem:[#allocation5 + $0x658] sm:$0xff]
    %v267 = vld [vmem:[#allocation5 + $0x660] sm:$0xff]
    %v268 = vld [vmem:[#allocation5 + $0x668] sm:$0xff]
    %v269 = vld [vmem:[#allocation5 + $0x670] sm:$0xff]
    %v270 = vld [vmem:[#allocation5 + $0x678] sm:$0xff]
    %v271 = vld [vmem:[#allocation5 + $0x680] sm:$0xff]
    %v272 = vld [vmem:[#allocation5 + $0x688] sm:$0xff]
    %v273 = vld [vmem:[#allocation5 + $0x690] sm:$0xff]
    %v274 = vld [vmem:[#allocation5 + $0x698] sm:$0xff]
    %v275 = vld [vmem:[#allocation5 + $0x6a0] sm:$0xff]
    %v276 = vld [vmem:[#allocation5 + $0x6a8] sm:$0xff]
    %v277 = vld [vmem:[#allocation5 + $0x6b0] sm:$0xff]
    %v278 = vld [vmem:[#allocation5 + $0x6b8] sm:$0xff]
    %v279 = vld [vmem:[#allocation5 + $0x6c0] sm:$0xff]
    %v280 = vld [vmem:[#allocation5 + $0x6c8] sm:$0xff]
    %v281 = vld [vmem:[#allocation5 + $0x6d0] sm:$0xff]
    %v282 = vld [vmem:[#allocation5 + $0x6d8] sm:$0xff]
    %v283 = vld [vmem:[#allocation5 + $0x6e0] sm:$0xff]
    %v284 = vld [vmem:[#allocation5 + $0x6e8] sm:$0xff]
    %v285 = vld [vmem:[#allocation5 + $0x6f0] sm:$0xff]
    %v286 = vld [vmem:[#allocation5 + $0x6f8] sm:$0xff]
    %v287 = vld [vmem:[#allocation5 + $0x700] sm:$0xff]
    %v288 = vld [vmem:[#allocation5 + $0x708] sm:$0xff]
    %v289 = vld [vmem:[#allocation5 + $0x710] sm:$0xff]
    %v290 = vld [vmem:[#allocation5 + $0x718] sm:$0xff]
    %v291 = vld [vmem:[#allocation5 + $0x720] sm:$0xff]
    %v292 = vld [vmem:[#allocation5 + $0x728] sm:$0xff]
    %v293 = vld [vmem:[#allocation5 + $0x730] sm:$0xff]
    %v294 = vld [vmem:[#allocation5 + $0x738] sm:$0xff]
    %v295 = vld [vmem:[#allocation5 + $0x740] sm:$0xff]
    %v296 = vld [vmem:[#allocation5 + $0x748] sm:$0xff]
    %v297 = vld [vmem:[#allocation5 + $0x750] sm:$0xff]
    %v298 = vld [vmem:[#allocation5 + $0x758] sm:$0xff]
    %v299 = vld [vmem:[#allocation5 + $0x760] sm:$0xff]
    %v300 = vld [vmem:[#allocation5 + $0x768] sm:$0xff]
    %v301 = vld [vmem:[#allocation5 + $0x770] sm:$0xff]
    %v302 = vld [vmem:[#allocation5 + $0x778] sm:$0xff]
    %v303 = vld [vmem:[#allocation5 + $0x780] sm:$0xff]
    %v304 = vld [vmem:[#allocation5 + $0x788] sm:$0xff]
    %v305 = vld [vmem:[#allocation5 + $0x790] sm:$0xff]
    %v306 = vld [vmem:[#allocation5 + $0x798] sm:$0xff]
    %v307 = vld [vmem:[#allocation5 + $0x7a0] sm:$0xff]
    %v308 = vld [vmem:[#allocation5 + $0x7a8] sm:$0xff]
    %v309 = vld [vmem:[#allocation5 + $0x7b0] sm:$0xff]
    %v310 = vld [vmem:[#allocation5 + $0x7b8] sm:$0xff]
    %v311 = vld [vmem:[#allocation5 + $0x7c0] sm:$0xff]
    %v312 = vld [vmem:[#allocation5 + $0x7c8] sm:$0xff]
    %v313 = vld [vmem:[#allocation5 + $0x7d0] sm:$0xff]
    %v314 = vld [vmem:[#allocation5 + $0x7d8] sm:$0xff]
    %v315 = vld [vmem:[#allocation5 + $0x7e0] sm:$0xff]
    %v316 = vld [vmem:[#allocation5 + $0x7e8] sm:$0xff]
    %v317 = vld [vmem:[#allocation5 + $0x7f0] sm:$0xff]
    %v318 = vld [vmem:[#allocation5 + $0x7f8] sm:$0xff]
    %v319 = vld [vmem:[#allocation5 + $0x800] sm:$0xff]
    %v320 = vld [vmem:[#allocation5 + $0x808] sm:$0xff]
    %v321 = vld [vmem:[#allocation5 + $0x810] sm:$0xff]
    %v322 = vld [vmem:[#allocation5 + $0x818] sm:$0xff]
    %v323 = vld [vmem:[#allocation5 + $0x820] sm:$0xff]
    %v324 = vld [vmem:[#allocation5 + $0x828] sm:$0xff]
    %v325 = vld [vmem:[#allocation5 + $0x830] sm:$0xff]
    %v326 = vld [vmem:[#allocation5 + $0x838] sm:$0xff]
    %v327 = vld [vmem:[#allocation5 + $0x840] sm:$0xff]
    %v328 = vld [vmem:[#allocation5 + $0x848] sm:$0xff]
    %v329 = vld [vmem:[#allocation5 + $0x850] sm:$0xff]
    %v330 = vld [vmem:[#allocation5 + $0x858] sm:$0xff]
    %v331 = vld [vmem:[#allocation5 + $0x860] sm:$0xff]
    %v332 = vld [vmem:[#allocation5 + $0x868] sm:$0xff]
    %v333 = vld [vmem:[#allocation5 + $0x870] sm:$0xff]
    %v334 = vld [vmem:[#allocation5 + $0x878] sm:$0xff]
    %v335 = vld [vmem:[#allocation5 + $0x880] sm:$0xff]
    %v336 = vld [vmem:[#allocation5 + $0x888] sm:$0xff]
    %v337 = vld [vmem:[#allocation5 + $0x890] sm:$0xff]
    %v338 = vld [vmem:[#allocation5 + $0x898] sm:$0xff]
    %v339 = vld [vmem:[#allocation5 + $0x8a0] sm:$0xff]
    %v340 = vld [vmem:[#allocation5 + $0x8a8] sm:$0xff]
    %v341 = vld [vmem:[#allocation5 + $0x8b0] sm:$0xff]
    %v342 = vld [vmem:[#allocation5 + $0x8b8] sm:$0xff]
    %v343 = vld [vmem:[#allocation5 + $0x8c0] sm:$0xff]
    %v344 = vld [vmem:[#allocation5 + $0x8c8] sm:$0xff]
    %v345 = vld [vmem:[#allocation5 + $0x8d0] sm:$0xff]
    %v346 = vld [vmem:[#allocation5 + $0x8d8] sm:$0xff]
    %v347 = vld [vmem:[#allocation5 + $0x8e0] sm:$0xff]
    %v348 = vld [vmem:[#allocation5 + $0x8e8] sm:$0xff]
    %v349 = vld [vmem:[#allocation5 + $0x8f0] sm:$0xff]
    %v350 = vld [vmem:[#allocation5 + $0x8f8] sm:$0xff]
    %v351 = vld [vmem:[#allocation7] sm:$0x3f]
    %v353 = vlaneseq
    %v354 = vshrl.u32 %v353, 7
    %v355 = vsub.s32 0, %v354
    %v356 = vrot.slane %v351, %v355
    %v357 = vlaneseq
    %v358 = vshrl.u32 %v357, 7
    %v359 = vsub.s32 1, %v358
    %v360 = vrot.slane %v351, %v359
    %v361 = vlaneseq
    %v362 = vshrl.u32 %v361, 7
    %v363 = vsub.s32 2, %v362
    %v364 = vrot.slane %v351, %v363
    %v365 = vlaneseq
    %v366 = vshrl.u32 %v365, 7
    %v367 = vsub.s32 3, %v366
    %v368 = vrot.slane %v351, %v367
    %v369 = vlaneseq
    %v370 = vshrl.u32 %v369, 7
    %v371 = vsub.s32 4, %v370
    %v372 = vrot.slane %v351, %v371
    %v373 = vlaneseq
    %v374 = vshrl.u32 %v373, 7
    %v375 = vsub.s32 5, %v374
    %v376 = vrot.slane %v351, %v375
    %v392 = vunpack.c.l.b16 %v54
    %v393 = vunpack.c.h.b16 %v54
    %v394 = vunpack.c.l.b16 %v55
    %v395 = vunpack.c.h.b16 %v55
    %v396 = vunpack.c.l.b16 %v56
    %v397 = vunpack.c.h.b16 %v56
    %v398 = vunpack.c.l.b16 %v57
    %v399 = vunpack.c.h.b16 %v57
    %v400 = vunpack.c.l.b16 %v58
    %v401 = vunpack.c.h.b16 %v58
    %v402 = vunpack.c.l.b16 %v59
    %v403 = vunpack.c.h.b16 %v59
    %v404 = vunpack.c.l.b16 %v60
    %v405 = vunpack.c.h.b16 %v60
    %v406 = vunpack.c.l.b16 %v61
    %v407 = vunpack.c.h.b16 %v61
    %v408 = vunpack.c.l.b16 %v62
    %v409 = vunpack.c.h.b16 %v62
    %v410 = vpack.c.b16 %v398, %v392
    %v411 = vpack.c.b16 %v399, %v393
    %v412 = vpack.c.b16 %v400, %v394
    %v413 = vpack.c.b16 %v401, %v395
    %v414 = vpack.c.b16 %v402, %v396
    %v415 = vpack.c.b16 %v403, %v397
    %v416 = vpack.c.b16 %v404, %v404
    %v417 = vpack.c.b16 %v405, %v405
    %v418 = vpack.c.b16 %v406, %v406
    %v419 = vpack.c.b16 %v407, %v407
    %v420 = vpack.c.b16 %v408, %v408
    %v421 = vpack.c.b16 %v409, %v409
    %v722 = vunpack.c.l.b16 %v63
    %v723 = vunpack.c.h.b16 %v63
    %v724 = vunpack.c.l.b16 %v64
    %v725 = vunpack.c.h.b16 %v64
    %v726 = vunpack.c.l.b16 %v65
    %v727 = vunpack.c.h.b16 %v65
    %v728 = vunpack.c.l.b16 %v66
    %v729 = vunpack.c.h.b16 %v66
    %v730 = vunpack.c.l.b16 %v67
    %v731 = vunpack.c.h.b16 %v67
    %v732 = vunpack.c.l.b16 %v68
    %v733 = vunpack.c.h.b16 %v68
    %v734 = vunpack.c.l.b16 %v69
    %v735 = vunpack.c.h.b16 %v69
    %v736 = vunpack.c.l.b16 %v70
    %v737 = vunpack.c.h.b16 %v70
    %v738 = vunpack.c.l.b16 %v71
    %v739 = vunpack.c.h.b16 %v71
    %v740 = vunpack.c.l.b16 %v72
    %v741 = vunpack.c.h.b16 %v72
    %v742 = vunpack.c.l.b16 %v73
    %v743 = vunpack.c.h.b16 %v73
    %v744 = vunpack.c.l.b16 %v74
    %v745 = vunpack.c.h.b16 %v74
    %v746 = vunpack.c.l.b16 %v75
    %v747 = vunpack.c.h.b16 %v75
    %v748 = vunpack.c.l.b16 %v76
    %v749 = vunpack.c.h.b16 %v76
    %v750 = vunpack.c.l.b16 %v77
    %v751 = vunpack.c.h.b16 %v77
    %v752 = vunpack.c.l.b16 %v78
    %v753 = vunpack.c.h.b16 %v78
    %v754 = vunpack.c.l.b16 %v79
    %v755 = vunpack.c.h.b16 %v79
    %v756 = vunpack.c.l.b16 %v80
    %v757 = vunpack.c.h.b16 %v80
    %v758 = vunpack.c.l.b16 %v81
    %v759 = vunpack.c.h.b16 %v81
    %v760 = vunpack.c.l.b16 %v82
    %v761 = vunpack.c.h.b16 %v82
    %v762 = vunpack.c.l.b16 %v83
    %v763 = vunpack.c.h.b16 %v83
    %v764 = vunpack.c.l.b16 %v84
    %v765 = vunpack.c.h.b16 %v84
    %v766 = vunpack.c.l.b16 %v85
    %v767 = vunpack.c.h.b16 %v85
    %v768 = vunpack.c.l.b16 %v86
    %v769 = vunpack.c.h.b16 %v86
    %v770 = vunpack.c.l.b16 %v87
    %v771 = vunpack.c.h.b16 %v87
    %v772 = vunpack.c.l.b16 %v88
    %v773 = vunpack.c.h.b16 %v88
    %v774 = vunpack.c.l.b16 %v89
    %v775 = vunpack.c.h.b16 %v89
    %v776 = vunpack.c.l.b16 %v90
    %v777 = vunpack.c.h.b16 %v90
    %v778 = vunpack.c.l.b16 %v91
    %v779 = vunpack.c.h.b16 %v91
    %v780 = vunpack.c.l.b16 %v92
    %v781 = vunpack.c.h.b16 %v92
    %v782 = vunpack.c.l.b16 %v93
    %v783 = vunpack.c.h.b16 %v93
    %v784 = vunpack.c.l.b16 %v94
    %v785 = vunpack.c.h.b16 %v94
    %v786 = vunpack.c.l.b16 %v95
    %v787 = vunpack.c.h.b16 %v95
    %v788 = vunpack.c.l.b16 %v96
    %v789 = vunpack.c.h.b16 %v96
    %v790 = vunpack.c.l.b16 %v97
    %v791 = vunpack.c.h.b16 %v97
    %v792 = vunpack.c.l.b16 %v98
    %v793 = vunpack.c.h.b16 %v98
    %v794 = vunpack.c.l.b16 %v99
    %v795 = vunpack.c.h.b16 %v99
    %v796 = vunpack.c.l.b16 %v100
    %v797 = vunpack.c.h.b16 %v100
    %v798 = vunpack.c.l.b16 %v101
    %v799 = vunpack.c.h.b16 %v101
    %v800 = vunpack.c.l.b16 %v102
    %v801 = vunpack.c.h.b16 %v102
    %v802 = vunpack.c.l.b16 %v103
    %v803 = vunpack.c.h.b16 %v103
    %v804 = vunpack.c.l.b16 %v104
    %v805 = vunpack.c.h.b16 %v104
    %v806 = vunpack.c.l.b16 %v105
    %v807 = vunpack.c.h.b16 %v105
    %v808 = vunpack.c.l.b16 %v106
    %v809 = vunpack.c.h.b16 %v106
    %v810 = vunpack.c.l.b16 %v107
    %v811 = vunpack.c.h.b16 %v107
    %v812 = vunpack.c.l.b16 %v108
    %v813 = vunpack.c.h.b16 %v108
    %v814 = vunpack.c.l.b16 %v109
    %v815 = vunpack.c.h.b16 %v109
    %v816 = vunpack.c.l.b16 %v110
    %v817 = vunpack.c.h.b16 %v110
    %v818 = vunpack.c.l.b16 %v111
    %v819 = vunpack.c.h.b16 %v111
    %v820 = vunpack.c.l.b16 %v112
    %v821 = vunpack.c.h.b16 %v112
    %v822 = vunpack.c.l.b16 %v113
    %v823 = vunpack.c.h.b16 %v113
    %v824 = vunpack.c.l.b16 %v114
    %v825 = vunpack.c.h.b16 %v114
    %v826 = vunpack.c.l.b16 %v115
    %v827 = vunpack.c.h.b16 %v115
    %v828 = vunpack.c.l.b16 %v116
    %v829 = vunpack.c.h.b16 %v116
    %v830 = vunpack.c.l.b16 %v117
    %v831 = vunpack.c.h.b16 %v117
    %v832 = vunpack.c.l.b16 %v118
    %v833 = vunpack.c.h.b16 %v118
    %v834 = vunpack.c.l.b16 %v119
    %v835 = vunpack.c.h.b16 %v119
    %v836 = vunpack.c.l.b16 %v120
    %v837 = vunpack.c.h.b16 %v120
    %v838 = vunpack.c.l.b16 %v121
    %v839 = vunpack.c.h.b16 %v121
    %v840 = vunpack.c.l.b16 %v122
    %v841 = vunpack.c.h.b16 %v122
    %v842 = vunpack.c.l.b16 %v123
    %v843 = vunpack.c.h.b16 %v123
    %v844 = vunpack.c.l.b16 %v124
    %v845 = vunpack.c.h.b16 %v124
    %v846 = vunpack.c.l.b16 %v125
    %v847 = vunpack.c.h.b16 %v125
    %v848 = vunpack.c.l.b16 %v126
    %v849 = vunpack.c.h.b16 %v126
    %v850 = vunpack.c.l.b16 %v127
    %v851 = vunpack.c.h.b16 %v127
    %v852 = vunpack.c.l.b16 %v128
    %v853 = vunpack.c.h.b16 %v128
    %v854 = vunpack.c.l.b16 %v129
    %v855 = vunpack.c.h.b16 %v129
    %v856 = vunpack.c.l.b16 %v130
    %v857 = vunpack.c.h.b16 %v130
    %v858 = vunpack.c.l.b16 %v131
    %v859 = vunpack.c.h.b16 %v131
    %v860 = vunpack.c.l.b16 %v132
    %v861 = vunpack.c.h.b16 %v132
    %v862 = vunpack.c.l.b16 %v133
    %v863 = vunpack.c.h.b16 %v133
    %v864 = vunpack.c.l.b16 %v134
    %v865 = vunpack.c.h.b16 %v134
    %v866 = vunpack.c.l.b16 %v135
    %v867 = vunpack.c.h.b16 %v135
    %v868 = vunpack.c.l.b16 %v136
    %v869 = vunpack.c.h.b16 %v136
    %v870 = vunpack.c.l.b16 %v137
    %v871 = vunpack.c.h.b16 %v137
    %v872 = vunpack.c.l.b16 %v138
    %v873 = vunpack.c.h.b16 %v138
    %v874 = vunpack.c.l.b16 %v139
    %v875 = vunpack.c.h.b16 %v139
    %v876 = vunpack.c.l.b16 %v140
    %v877 = vunpack.c.h.b16 %v140
    %v878 = vunpack.c.l.b16 %v141
    %v879 = vunpack.c.h.b16 %v141
    %v880 = vunpack.c.l.b16 %v142
    %v881 = vunpack.c.h.b16 %v142
    %v882 = vunpack.c.l.b16 %v143
    %v883 = vunpack.c.h.b16 %v143
    %v884 = vunpack.c.l.b16 %v144
    %v885 = vunpack.c.h.b16 %v144
    %v886 = vunpack.c.l.b16 %v145
    %v887 = vunpack.c.h.b16 %v145
    %v888 = vunpack.c.l.b16 %v146
    %v889 = vunpack.c.h.b16 %v146
    %v890 = vunpack.c.l.b16 %v147
    %v891 = vunpack.c.h.b16 %v147
    %v892 = vunpack.c.l.b16 %v148
    %v893 = vunpack.c.h.b16 %v148
    %v894 = vunpack.c.l.b16 %v149
    %v895 = vunpack.c.h.b16 %v149
    %v896 = vunpack.c.l.b16 %v150
    %v897 = vunpack.c.h.b16 %v150
    %v898 = vunpack.c.l.b16 %v151
    %v899 = vunpack.c.h.b16 %v151
    %v900 = vunpack.c.l.b16 %v152
    %v901 = vunpack.c.h.b16 %v152
    %v902 = vunpack.c.l.b16 %v153
    %v903 = vunpack.c.h.b16 %v153
    %v904 = vunpack.c.l.b16 %v154
    %v905 = vunpack.c.h.b16 %v154
    %v906 = vunpack.c.l.b16 %v155
    %v907 = vunpack.c.h.b16 %v155
    %v908 = vunpack.c.l.b16 %v156
    %v909 = vunpack.c.h.b16 %v156
    %v910 = vunpack.c.l.b16 %v157
    %v911 = vunpack.c.h.b16 %v157
    %v912 = vunpack.c.l.b16 %v158
    %v913 = vunpack.c.h.b16 %v158
    %v914 = vunpack.c.l.b16 %v159
    %v915 = vunpack.c.h.b16 %v159
    %v916 = vunpack.c.l.b16 %v160
    %v917 = vunpack.c.h.b16 %v160
    %v918 = vunpack.c.l.b16 %v161
    %v919 = vunpack.c.h.b16 %v161
    %v920 = vunpack.c.l.b16 %v162
    %v921 = vunpack.c.h.b16 %v162
    %v922 = vunpack.c.l.b16 %v163
    %v923 = vunpack.c.h.b16 %v163
    %v924 = vunpack.c.l.b16 %v164
    %v925 = vunpack.c.h.b16 %v164
    %v926 = vunpack.c.l.b16 %v165
    %v927 = vunpack.c.h.b16 %v165
    %v928 = vunpack.c.l.b16 %v166
    %v929 = vunpack.c.h.b16 %v166
    %v930 = vunpack.c.l.b16 %v167
    %v931 = vunpack.c.h.b16 %v167
    %v932 = vunpack.c.l.b16 %v168
    %v933 = vunpack.c.h.b16 %v168
    %v934 = vunpack.c.l.b16 %v169
    %v935 = vunpack.c.h.b16 %v169
    %v936 = vunpack.c.l.b16 %v170
    %v937 = vunpack.c.h.b16 %v170
    %v938 = vunpack.c.l.b16 %v171
    %v939 = vunpack.c.h.b16 %v171
    %v940 = vunpack.c.l.b16 %v172
    %v941 = vunpack.c.h.b16 %v172
    %v942 = vunpack.c.l.b16 %v173
    %v943 = vunpack.c.h.b16 %v173
    %v944 = vunpack.c.l.b16 %v174
    %v945 = vunpack.c.h.b16 %v174
    %v946 = vunpack.c.l.b16 %v175
    %v947 = vunpack.c.h.b16 %v175
    %v948 = vunpack.c.l.b16 %v176
    %v949 = vunpack.c.h.b16 %v176
    %v950 = vunpack.c.l.b16 %v177
    %v951 = vunpack.c.h.b16 %v177
    %v952 = vunpack.c.l.b16 %v178
    %v953 = vunpack.c.h.b16 %v178
    %v954 = vunpack.c.l.b16 %v179
    %v955 = vunpack.c.h.b16 %v179
    %v956 = vunpack.c.l.b16 %v180
    %v957 = vunpack.c.h.b16 %v180
    %v958 = vunpack.c.l.b16 %v181
    %v959 = vunpack.c.h.b16 %v181
    %v960 = vunpack.c.l.b16 %v182
    %v961 = vunpack.c.h.b16 %v182
    %v962 = vunpack.c.l.b16 %v183
    %v963 = vunpack.c.h.b16 %v183
    %v964 = vunpack.c.l.b16 %v184
    %v965 = vunpack.c.h.b16 %v184
    %v966 = vunpack.c.l.b16 %v185
    %v967 = vunpack.c.h.b16 %v185
    %v968 = vunpack.c.l.b16 %v186
    %v969 = vunpack.c.h.b16 %v186
    %v970 = vunpack.c.l.b16 %v187
    %v971 = vunpack.c.h.b16 %v187
    %v972 = vunpack.c.l.b16 %v188
    %v973 = vunpack.c.h.b16 %v188
    %v974 = vunpack.c.l.b16 %v189
    %v975 = vunpack.c.h.b16 %v189
    %v976 = vunpack.c.l.b16 %v190
    %v977 = vunpack.c.h.b16 %v190
    %v978 = vunpack.c.l.b16 %v191
    %v979 = vunpack.c.h.b16 %v191
    %v980 = vunpack.c.l.b16 %v192
    %v981 = vunpack.c.h.b16 %v192
    %v982 = vunpack.c.l.b16 %v193
    %v983 = vunpack.c.h.b16 %v193
    %v984 = vunpack.c.l.b16 %v194
    %v985 = vunpack.c.h.b16 %v194
    %v986 = vunpack.c.l.b16 %v195
    %v987 = vunpack.c.h.b16 %v195
    %v988 = vunpack.c.l.b16 %v196
    %v989 = vunpack.c.h.b16 %v196
    %v990 = vunpack.c.l.b16 %v197
    %v991 = vunpack.c.h.b16 %v197
    %v992 = vunpack.c.l.b16 %v198
    %v993 = vunpack.c.h.b16 %v198
    %v994 = vunpack.c.l.b16 %v199
    %v995 = vunpack.c.h.b16 %v199
    %v996 = vunpack.c.l.b16 %v200
    %v997 = vunpack.c.h.b16 %v200
    %v998 = vunpack.c.l.b16 %v201
    %v999 = vunpack.c.h.b16 %v201
    %v1000 = vunpack.c.l.b16 %v202
    %v1001 = vunpack.c.h.b16 %v202
    %v1002 = vunpack.c.l.b16 %v203
    %v1003 = vunpack.c.h.b16 %v203
    %v1004 = vunpack.c.l.b16 %v204
    %v1005 = vunpack.c.h.b16 %v204
    %v1006 = vunpack.c.l.b16 %v205
    %v1007 = vunpack.c.h.b16 %v205
    %v1008 = vunpack.c.l.b16 %v206
    %v1009 = vunpack.c.h.b16 %v206
    %v1010 = vunpack.c.l.b16 %v207
    %v1011 = vunpack.c.h.b16 %v207
    %v1012 = vunpack.c.l.b16 %v208
    %v1013 = vunpack.c.h.b16 %v208
    %v1014 = vunpack.c.l.b16 %v209
    %v1015 = vunpack.c.h.b16 %v209
    %v1016 = vunpack.c.l.b16 %v210
    %v1017 = vunpack.c.h.b16 %v210
    %v1018 = vunpack.c.l.b16 %v211
    %v1019 = vunpack.c.h.b16 %v211
    %v1020 = vunpack.c.l.b16 %v212
    %v1021 = vunpack.c.h.b16 %v212
    %v1022 = vunpack.c.l.b16 %v213
    %v1023 = vunpack.c.h.b16 %v213
    %v1024 = vunpack.c.l.b16 %v214
    %v1025 = vunpack.c.h.b16 %v214
    %v1026 = vunpack.c.l.b16 %v215
    %v1027 = vunpack.c.h.b16 %v215
    %v1028 = vunpack.c.l.b16 %v216
    %v1029 = vunpack.c.h.b16 %v216
    %v1030 = vunpack.c.l.b16 %v217
    %v1031 = vunpack.c.h.b16 %v217
    %v1032 = vunpack.c.l.b16 %v218
    %v1033 = vunpack.c.h.b16 %v218
    %v1034 = vunpack.c.l.b16 %v219
    %v1035 = vunpack.c.h.b16 %v219
    %v1036 = vunpack.c.l.b16 %v220
    %v1037 = vunpack.c.h.b16 %v220
    %v1038 = vunpack.c.l.b16 %v221
    %v1039 = vunpack.c.h.b16 %v221
    %v1040 = vunpack.c.l.b16 %v222
    %v1041 = vunpack.c.h.b16 %v222
    %v1042 = vunpack.c.l.b16 %v223
    %v1043 = vunpack.c.h.b16 %v223
    %v1044 = vunpack.c.l.b16 %v224
    %v1045 = vunpack.c.h.b16 %v224
    %v1046 = vunpack.c.l.b16 %v225
    %v1047 = vunpack.c.h.b16 %v225
    %v1048 = vunpack.c.l.b16 %v226
    %v1049 = vunpack.c.h.b16 %v226
    %v1050 = vunpack.c.l.b16 %v227
    %v1051 = vunpack.c.h.b16 %v227
    %v1052 = vunpack.c.l.b16 %v228
    %v1053 = vunpack.c.h.b16 %v228
    %v1054 = vunpack.c.l.b16 %v229
    %v1055 = vunpack.c.h.b16 %v229
    %v1056 = vunpack.c.l.b16 %v230
    %v1057 = vunpack.c.h.b16 %v230
    %v1058 = vunpack.c.l.b16 %v231
    %v1059 = vunpack.c.h.b16 %v231
    %v1060 = vunpack.c.l.b16 %v232
    %v1061 = vunpack.c.h.b16 %v232
    %v1062 = vunpack.c.l.b16 %v233
    %v1063 = vunpack.c.h.b16 %v233
    %v1064 = vunpack.c.l.b16 %v234
    %v1065 = vunpack.c.h.b16 %v234
    %v1066 = vunpack.c.l.b16 %v235
    %v1067 = vunpack.c.h.b16 %v235
    %v1068 = vunpack.c.l.b16 %v236
    %v1069 = vunpack.c.h.b16 %v236
    %v1070 = vunpack.c.l.b16 %v237
    %v1071 = vunpack.c.h.b16 %v237
    %v1072 = vunpack.c.l.b16 %v238
    %v1073 = vunpack.c.h.b16 %v238
    %v1074 = vunpack.c.l.b16 %v239
    %v1075 = vunpack.c.h.b16 %v239
    %v1076 = vunpack.c.l.b16 %v240
    %v1077 = vunpack.c.h.b16 %v240
    %v1078 = vunpack.c.l.b16 %v241
    %v1079 = vunpack.c.h.b16 %v241
    %v1080 = vunpack.c.l.b16 %v242
    %v1081 = vunpack.c.h.b16 %v242
    %v1082 = vunpack.c.l.b16 %v243
    %v1083 = vunpack.c.h.b16 %v243
    %v1084 = vunpack.c.l.b16 %v244
    %v1085 = vunpack.c.h.b16 %v244
    %v1086 = vunpack.c.l.b16 %v245
    %v1087 = vunpack.c.h.b16 %v245
    %v1088 = vunpack.c.l.b16 %v246
    %v1089 = vunpack.c.h.b16 %v246
    %v1090 = vunpack.c.l.b16 %v247
    %v1091 = vunpack.c.h.b16 %v247
    %v1092 = vunpack.c.l.b16 %v248
    %v1093 = vunpack.c.h.b16 %v248
    %v1094 = vunpack.c.l.b16 %v249
    %v1095 = vunpack.c.h.b16 %v249
    %v1096 = vunpack.c.l.b16 %v250
    %v1097 = vunpack.c.h.b16 %v250
    %v1098 = vunpack.c.l.b16 %v251
    %v1099 = vunpack.c.h.b16 %v251
    %v1100 = vunpack.c.l.b16 %v252
    %v1101 = vunpack.c.h.b16 %v252
    %v1102 = vunpack.c.l.b16 %v253
    %v1103 = vunpack.c.h.b16 %v253
    %v1104 = vunpack.c.l.b16 %v254
    %v1105 = vunpack.c.h.b16 %v254
    %v1106 = vunpack.c.l.b16 %v255
    %v1107 = vunpack.c.h.b16 %v255
    %v1108 = vunpack.c.l.b16 %v256
    %v1109 = vunpack.c.h.b16 %v256
    %v1110 = vunpack.c.l.b16 %v257
    %v1111 = vunpack.c.h.b16 %v257
    %v1112 = vunpack.c.l.b16 %v258
    %v1113 = vunpack.c.h.b16 %v258
    %v1114 = vunpack.c.l.b16 %v259
    %v1115 = vunpack.c.h.b16 %v259
    %v1116 = vunpack.c.l.b16 %v260
    %v1117 = vunpack.c.h.b16 %v260
    %v1118 = vunpack.c.l.b16 %v261
    %v1119 = vunpack.c.h.b16 %v261
    %v1120 = vunpack.c.l.b16 %v262
    %v1121 = vunpack.c.h.b16 %v262
    %v1122 = vunpack.c.l.b16 %v263
    %v1123 = vunpack.c.h.b16 %v263
    %v1124 = vunpack.c.l.b16 %v264
    %v1125 = vunpack.c.h.b16 %v264
    %v1126 = vunpack.c.l.b16 %v265
    %v1127 = vunpack.c.h.b16 %v265
    %v1128 = vunpack.c.l.b16 %v266
    %v1129 = vunpack.c.h.b16 %v266
    %v1130 = vunpack.c.l.b16 %v267
    %v1131 = vunpack.c.h.b16 %v267
    %v1132 = vunpack.c.l.b16 %v268
    %v1133 = vunpack.c.h.b16 %v268
    %v1134 = vunpack.c.l.b16 %v269
    %v1135 = vunpack.c.h.b16 %v269
    %v1136 = vunpack.c.l.b16 %v270
    %v1137 = vunpack.c.h.b16 %v270
    %v1138 = vunpack.c.l.b16 %v271
    %v1139 = vunpack.c.h.b16 %v271
    %v1140 = vunpack.c.l.b16 %v272
    %v1141 = vunpack.c.h.b16 %v272
    %v1142 = vunpack.c.l.b16 %v273
    %v1143 = vunpack.c.h.b16 %v273
    %v1144 = vunpack.c.l.b16 %v274
    %v1145 = vunpack.c.h.b16 %v274
    %v1146 = vunpack.c.l.b16 %v275
    %v1147 = vunpack.c.h.b16 %v275
    %v1148 = vunpack.c.l.b16 %v276
    %v1149 = vunpack.c.h.b16 %v276
    %v1150 = vunpack.c.l.b16 %v277
    %v1151 = vunpack.c.h.b16 %v277
    %v1152 = vunpack.c.l.b16 %v278
    %v1153 = vunpack.c.h.b16 %v278
    %v1154 = vunpack.c.l.b16 %v279
    %v1155 = vunpack.c.h.b16 %v279
    %v1156 = vunpack.c.l.b16 %v280
    %v1157 = vunpack.c.h.b16 %v280
    %v1158 = vunpack.c.l.b16 %v281
    %v1159 = vunpack.c.h.b16 %v281
    %v1160 = vunpack.c.l.b16 %v282
    %v1161 = vunpack.c.h.b16 %v282
    %v1162 = vunpack.c.l.b16 %v283
    %v1163 = vunpack.c.h.b16 %v283
    %v1164 = vunpack.c.l.b16 %v284
    %v1165 = vunpack.c.h.b16 %v284
    %v1166 = vunpack.c.l.b16 %v285
    %v1167 = vunpack.c.h.b16 %v285
    %v1168 = vunpack.c.l.b16 %v286
    %v1169 = vunpack.c.h.b16 %v286
    %v1170 = vunpack.c.l.b16 %v287
    %v1171 = vunpack.c.h.b16 %v287
    %v1172 = vunpack.c.l.b16 %v288
    %v1173 = vunpack.c.h.b16 %v288
    %v1174 = vunpack.c.l.b16 %v289
    %v1175 = vunpack.c.h.b16 %v289
    %v1176 = vunpack.c.l.b16 %v290
    %v1177 = vunpack.c.h.b16 %v290
    %v1178 = vunpack.c.l.b16 %v291
    %v1179 = vunpack.c.h.b16 %v291
    %v1180 = vunpack.c.l.b16 %v292
    %v1181 = vunpack.c.h.b16 %v292
    %v1182 = vunpack.c.l.b16 %v293
    %v1183 = vunpack.c.h.b16 %v293
    %v1184 = vunpack.c.l.b16 %v294
    %v1185 = vunpack.c.h.b16 %v294
    %v1186 = vunpack.c.l.b16 %v295
    %v1187 = vunpack.c.h.b16 %v295
    %v1188 = vunpack.c.l.b16 %v296
    %v1189 = vunpack.c.h.b16 %v296
    %v1190 = vunpack.c.l.b16 %v297
    %v1191 = vunpack.c.h.b16 %v297
    %v1192 = vunpack.c.l.b16 %v298
    %v1193 = vunpack.c.h.b16 %v298
    %v1194 = vunpack.c.l.b16 %v299
    %v1195 = vunpack.c.h.b16 %v299
    %v1196 = vunpack.c.l.b16 %v300
    %v1197 = vunpack.c.h.b16 %v300
    %v1198 = vunpack.c.l.b16 %v301
    %v1199 = vunpack.c.h.b16 %v301
    %v1200 = vunpack.c.l.b16 %v302
    %v1201 = vunpack.c.h.b16 %v302
    %v1202 = vunpack.c.l.b16 %v303
    %v1203 = vunpack.c.h.b16 %v303
    %v1204 = vunpack.c.l.b16 %v304
    %v1205 = vunpack.c.h.b16 %v304
    %v1206 = vunpack.c.l.b16 %v305
    %v1207 = vunpack.c.h.b16 %v305
    %v1208 = vunpack.c.l.b16 %v306
    %v1209 = vunpack.c.h.b16 %v306
    %v1210 = vunpack.c.l.b16 %v307
    %v1211 = vunpack.c.h.b16 %v307
    %v1212 = vunpack.c.l.b16 %v308
    %v1213 = vunpack.c.h.b16 %v308
    %v1214 = vunpack.c.l.b16 %v309
    %v1215 = vunpack.c.h.b16 %v309
    %v1216 = vunpack.c.l.b16 %v310
    %v1217 = vunpack.c.h.b16 %v310
    %v1218 = vunpack.c.l.b16 %v311
    %v1219 = vunpack.c.h.b16 %v311
    %v1220 = vunpack.c.l.b16 %v312
    %v1221 = vunpack.c.h.b16 %v312
    %v1222 = vunpack.c.l.b16 %v313
    %v1223 = vunpack.c.h.b16 %v313
    %v1224 = vunpack.c.l.b16 %v314
    %v1225 = vunpack.c.h.b16 %v314
    %v1226 = vunpack.c.l.b16 %v315
    %v1227 = vunpack.c.h.b16 %v315
    %v1228 = vunpack.c.l.b16 %v316
    %v1229 = vunpack.c.h.b16 %v316
    %v1230 = vunpack.c.l.b16 %v317
    %v1231 = vunpack.c.h.b16 %v317
    %v1232 = vunpack.c.l.b16 %v318
    %v1233 = vunpack.c.h.b16 %v318
    %v1234 = vunpack.c.l.b16 %v319
    %v1235 = vunpack.c.h.b16 %v319
    %v1236 = vunpack.c.l.b16 %v320
    %v1237 = vunpack.c.h.b16 %v320
    %v1238 = vunpack.c.l.b16 %v321
    %v1239 = vunpack.c.h.b16 %v321
    %v1240 = vunpack.c.l.b16 %v322
    %v1241 = vunpack.c.h.b16 %v322
    %v1242 = vunpack.c.l.b16 %v323
    %v1243 = vunpack.c.h.b16 %v323
    %v1244 = vunpack.c.l.b16 %v324
    %v1245 = vunpack.c.h.b16 %v324
    %v1246 = vunpack.c.l.b16 %v325
    %v1247 = vunpack.c.h.b16 %v325
    %v1248 = vunpack.c.l.b16 %v326
    %v1249 = vunpack.c.h.b16 %v326
    %v1250 = vunpack.c.l.b16 %v327
    %v1251 = vunpack.c.h.b16 %v327
    %v1252 = vunpack.c.l.b16 %v328
    %v1253 = vunpack.c.h.b16 %v328
    %v1254 = vunpack.c.l.b16 %v329
    %v1255 = vunpack.c.h.b16 %v329
    %v1256 = vunpack.c.l.b16 %v330
    %v1257 = vunpack.c.h.b16 %v330
    %v1258 = vunpack.c.l.b16 %v331
    %v1259 = vunpack.c.h.b16 %v331
    %v1260 = vunpack.c.l.b16 %v332
    %v1261 = vunpack.c.h.b16 %v332
    %v1262 = vunpack.c.l.b16 %v333
    %v1263 = vunpack.c.h.b16 %v333
    %v1264 = vunpack.c.l.b16 %v334
    %v1265 = vunpack.c.h.b16 %v334
    %v1266 = vunpack.c.l.b16 %v335
    %v1267 = vunpack.c.h.b16 %v335
    %v1268 = vunpack.c.l.b16 %v336
    %v1269 = vunpack.c.h.b16 %v336
    %v1270 = vunpack.c.l.b16 %v337
    %v1271 = vunpack.c.h.b16 %v337
    %v1272 = vunpack.c.l.b16 %v338
    %v1273 = vunpack.c.h.b16 %v338
    %v1274 = vunpack.c.l.b16 %v339
    %v1275 = vunpack.c.h.b16 %v339
    %v1276 = vunpack.c.l.b16 %v340
    %v1277 = vunpack.c.h.b16 %v340
    %v1278 = vunpack.c.l.b16 %v341
    %v1279 = vunpack.c.h.b16 %v341
    %v1280 = vunpack.c.l.b16 %v342
    %v1281 = vunpack.c.h.b16 %v342
    %v1282 = vunpack.c.l.b16 %v343
    %v1283 = vunpack.c.h.b16 %v343
    %v1284 = vunpack.c.l.b16 %v344
    %v1285 = vunpack.c.h.b16 %v344
    %v1286 = vunpack.c.l.b16 %v345
    %v1287 = vunpack.c.h.b16 %v345
    %v1288 = vunpack.c.l.b16 %v346
    %v1289 = vunpack.c.h.b16 %v346
    %v1290 = vunpack.c.l.b16 %v347
    %v1291 = vunpack.c.h.b16 %v347
    %v1292 = vunpack.c.l.b16 %v348
    %v1293 = vunpack.c.h.b16 %v348
    %v1294 = vunpack.c.l.b16 %v349
    %v1295 = vunpack.c.h.b16 %v349
    %v1296 = vunpack.c.l.b16 %v350
    %v1297 = vunpack.c.h.b16 %v350
    %v1298 = vpack.c.b16 %v728, %v722
    %v1299 = vpack.c.b16 %v729, %v723
    %v1300 = vpack.c.b16 %v730, %v724
    %v1301 = vpack.c.b16 %v731, %v725
    %v1302 = vpack.c.b16 %v732, %v726
    %v1303 = vpack.c.b16 %v733, %v727
    %v1304 = vpack.c.b16 %v740, %v734
    %v1305 = vpack.c.b16 %v741, %v735
    %v1306 = vpack.c.b16 %v742, %v736
    %v1307 = vpack.c.b16 %v743, %v737
    %v1308 = vpack.c.b16 %v744, %v738
    %v1309 = vpack.c.b16 %v745, %v739
    %v1310 = vpack.c.b16 %v752, %v746
    %v1311 = vpack.c.b16 %v753, %v747
    %v1312 = vpack.c.b16 %v754, %v748
    %v1313 = vpack.c.b16 %v755, %v749
    %v1314 = vpack.c.b16 %v756, %v750
    %v1315 = vpack.c.b16 %v757, %v751
    %v1316 = vpack.c.b16 %v764, %v758
    %v1317 = vpack.c.b16 %v765, %v759
    %v1318 = vpack.c.b16 %v766, %v760
    %v1319 = vpack.c.b16 %v767, %v761
    %v1320 = vpack.c.b16 %v768, %v762
    %v1321 = vpack.c.b16 %v769, %v763
    %v1322 = vpack.c.b16 %v776, %v770
    %v1323 = vpack.c.b16 %v777, %v771
    %v1324 = vpack.c.b16 %v778, %v772
    %v1325 = vpack.c.b16 %v779, %v773
    %v1326 = vpack.c.b16 %v780, %v774
    %v1327 = vpack.c.b16 %v781, %v775
    %v1328 = vpack.c.b16 %v788, %v782
    %v1329 = vpack.c.b16 %v789, %v783
    %v1330 = vpack.c.b16 %v790, %v784
    %v1331 = vpack.c.b16 %v791, %v785
    %v1332 = vpack.c.b16 %v792, %v786
    %v1333 = vpack.c.b16 %v793, %v787
    %v1334 = vpack.c.b16 %v800, %v794
    %v1335 = vpack.c.b16 %v801, %v795
    %v1336 = vpack.c.b16 %v802, %v796
    %v1337 = vpack.c.b16 %v803, %v797
    %v1338 = vpack.c.b16 %v804, %v798
    %v1339 = vpack.c.b16 %v805, %v799
    %v1340 = vpack.c.b16 %v812, %v806
    %v1341 = vpack.c.b16 %v813, %v807
    %v1342 = vpack.c.b16 %v814, %v808
    %v1343 = vpack.c.b16 %v815, %v809
    %v1344 = vpack.c.b16 %v816, %v810
    %v1345 = vpack.c.b16 %v817, %v811
    %v1346 = vpack.c.b16 %v824, %v818
    %v1347 = vpack.c.b16 %v825, %v819
    %v1348 = vpack.c.b16 %v826, %v820
    %v1349 = vpack.c.b16 %v827, %v821
    %v1350 = vpack.c.b16 %v828, %v822
    %v1351 = vpack.c.b16 %v829, %v823
    %v1352 = vpack.c.b16 %v836, %v830
    %v1353 = vpack.c.b16 %v837, %v831
    %v1354 = vpack.c.b16 %v838, %v832
    %v1355 = vpack.c.b16 %v839, %v833
    %v1356 = vpack.c.b16 %v840, %v834
    %v1357 = vpack.c.b16 %v841, %v835
    %v1358 = vpack.c.b16 %v848, %v842
    %v1359 = vpack.c.b16 %v849, %v843
    %v1360 = vpack.c.b16 %v850, %v844
    %v1361 = vpack.c.b16 %v851, %v845
    %v1362 = vpack.c.b16 %v852, %v846
    %v1363 = vpack.c.b16 %v853, %v847
    %v1364 = vpack.c.b16 %v860, %v854
    %v1365 = vpack.c.b16 %v861, %v855
    %v1366 = vpack.c.b16 %v862, %v856
    %v1367 = vpack.c.b16 %v863, %v857
    %v1368 = vpack.c.b16 %v864, %v858
    %v1369 = vpack.c.b16 %v865, %v859
    %v1370 = vpack.c.b16 %v872, %v866
    %v1371 = vpack.c.b16 %v873, %v867
    %v1372 = vpack.c.b16 %v874, %v868
    %v1373 = vpack.c.b16 %v875, %v869
    %v1374 = vpack.c.b16 %v876, %v870
    %v1375 = vpack.c.b16 %v877, %v871
    %v1376 = vpack.c.b16 %v884, %v878
    %v1377 = vpack.c.b16 %v885, %v879
    %v1378 = vpack.c.b16 %v886, %v880
    %v1379 = vpack.c.b16 %v887, %v881
    %v1380 = vpack.c.b16 %v888, %v882
    %v1381 = vpack.c.b16 %v889, %v883
    %v1382 = vpack.c.b16 %v896, %v890
    %v1383 = vpack.c.b16 %v897, %v891
    %v1384 = vpack.c.b16 %v898, %v892
    %v1385 = vpack.c.b16 %v899, %v893
    %v1386 = vpack.c.b16 %v900, %v894
    %v1387 = vpack.c.b16 %v901, %v895
    %v1388 = vpack.c.b16 %v908, %v902
    %v1389 = vpack.c.b16 %v909, %v903
    %v1390 = vpack.c.b16 %v910, %v904
    %v1391 = vpack.c.b16 %v911, %v905
    %v1392 = vpack.c.b16 %v912, %v906
    %v1393 = vpack.c.b16 %v913, %v907
    %v1394 = vpack.c.b16 %v920, %v914
    %v1395 = vpack.c.b16 %v921, %v915
    %v1396 = vpack.c.b16 %v922, %v916
    %v1397 = vpack.c.b16 %v923, %v917
    %v1398 = vpack.c.b16 %v924, %v918
    %v1399 = vpack.c.b16 %v925, %v919
    %v1400 = vpack.c.b16 %v932, %v926
    %v1401 = vpack.c.b16 %v933, %v927
    %v1402 = vpack.c.b16 %v934, %v928
    %v1403 = vpack.c.b16 %v935, %v929
    %v1404 = vpack.c.b16 %v936, %v930
    %v1405 = vpack.c.b16 %v937, %v931
    %v1406 = vpack.c.b16 %v944, %v938
    %v1407 = vpack.c.b16 %v945, %v939
    %v1408 = vpack.c.b16 %v946, %v940
    %v1409 = vpack.c.b16 %v947, %v941
    %v1410 = vpack.c.b16 %v948, %v942
    %v1411 = vpack.c.b16 %v949, %v943
    %v1412 = vpack.c.b16 %v956, %v950
    %v1413 = vpack.c.b16 %v957, %v951
    %v1414 = vpack.c.b16 %v958, %v952
    %v1415 = vpack.c.b16 %v959, %v953
    %v1416 = vpack.c.b16 %v960, %v954
    %v1417 = vpack.c.b16 %v961, %v955
    %v1418 = vpack.c.b16 %v968, %v962
    %v1419 = vpack.c.b16 %v969, %v963
    %v1420 = vpack.c.b16 %v970, %v964
    %v1421 = vpack.c.b16 %v971, %v965
    %v1422 = vpack.c.b16 %v972, %v966
    %v1423 = vpack.c.b16 %v973, %v967
    %v1424 = vpack.c.b16 %v980, %v974
    %v1425 = vpack.c.b16 %v981, %v975
    %v1426 = vpack.c.b16 %v982, %v976
    %v1427 = vpack.c.b16 %v983, %v977
    %v1428 = vpack.c.b16 %v984, %v978
    %v1429 = vpack.c.b16 %v985, %v979
    %v1430 = vpack.c.b16 %v992, %v986
    %v1431 = vpack.c.b16 %v993, %v987
    %v1432 = vpack.c.b16 %v994, %v988
    %v1433 = vpack.c.b16 %v995, %v989
    %v1434 = vpack.c.b16 %v996, %v990
    %v1435 = vpack.c.b16 %v997, %v991
    %v1436 = vpack.c.b16 %v1004, %v998
    %v1437 = vpack.c.b16 %v1005, %v999
    %v1438 = vpack.c.b16 %v1006, %v1000
    %v1439 = vpack.c.b16 %v1007, %v1001
    %v1440 = vpack.c.b16 %v1008, %v1002
    %v1441 = vpack.c.b16 %v1009, %v1003
    %v1442 = vpack.c.b16 %v1016, %v1010
    %v1443 = vpack.c.b16 %v1017, %v1011
    %v1444 = vpack.c.b16 %v1018, %v1012
    %v1445 = vpack.c.b16 %v1019, %v1013
    %v1446 = vpack.c.b16 %v1020, %v1014
    %v1447 = vpack.c.b16 %v1021, %v1015
    %v1448 = vpack.c.b16 %v1028, %v1022
    %v1449 = vpack.c.b16 %v1029, %v1023
    %v1450 = vpack.c.b16 %v1030, %v1024
    %v1451 = vpack.c.b16 %v1031, %v1025
    %v1452 = vpack.c.b16 %v1032, %v1026
    %v1453 = vpack.c.b16 %v1033, %v1027
    %v1454 = vpack.c.b16 %v1040, %v1034
    %v1455 = vpack.c.b16 %v1041, %v1035
    %v1456 = vpack.c.b16 %v1042, %v1036
    %v1457 = vpack.c.b16 %v1043, %v1037
    %v1458 = vpack.c.b16 %v1044, %v1038
    %v1459 = vpack.c.b16 %v1045, %v1039
    %v1460 = vpack.c.b16 %v1052, %v1046
    %v1461 = vpack.c.b16 %v1053, %v1047
    %v1462 = vpack.c.b16 %v1054, %v1048
    %v1463 = vpack.c.b16 %v1055, %v1049
    %v1464 = vpack.c.b16 %v1056, %v1050
    %v1465 = vpack.c.b16 %v1057, %v1051
    %v1466 = vpack.c.b16 %v1064, %v1058
    %v1467 = vpack.c.b16 %v1065, %v1059
    %v1468 = vpack.c.b16 %v1066, %v1060
    %v1469 = vpack.c.b16 %v1067, %v1061
    %v1470 = vpack.c.b16 %v1068, %v1062
    %v1471 = vpack.c.b16 %v1069, %v1063
    %v1472 = vpack.c.b16 %v1076, %v1070
    %v1473 = vpack.c.b16 %v1077, %v1071
    %v1474 = vpack.c.b16 %v1078, %v1072
    %v1475 = vpack.c.b16 %v1079, %v1073
    %v1476 = vpack.c.b16 %v1080, %v1074
    %v1477 = vpack.c.b16 %v1081, %v1075
    %v1478 = vpack.c.b16 %v1088, %v1082
    %v1479 = vpack.c.b16 %v1089, %v1083
    %v1480 = vpack.c.b16 %v1090, %v1084
    %v1481 = vpack.c.b16 %v1091, %v1085
    %v1482 = vpack.c.b16 %v1092, %v1086
    %v1483 = vpack.c.b16 %v1093, %v1087
    %v1484 = vpack.c.b16 %v1100, %v1094
    %v1485 = vpack.c.b16 %v1101, %v1095
    %v1486 = vpack.c.b16 %v1102, %v1096
    %v1487 = vpack.c.b16 %v1103, %v1097
    %v1488 = vpack.c.b16 %v1104, %v1098
    %v1489 = vpack.c.b16 %v1105, %v1099
    %v1490 = vpack.c.b16 %v1112, %v1106
    %v1491 = vpack.c.b16 %v1113, %v1107
    %v1492 = vpack.c.b16 %v1114, %v1108
    %v1493 = vpack.c.b16 %v1115, %v1109
    %v1494 = vpack.c.b16 %v1116, %v1110
    %v1495 = vpack.c.b16 %v1117, %v1111
    %v1496 = vpack.c.b16 %v1124, %v1118
    %v1497 = vpack.c.b16 %v1125, %v1119
    %v1498 = vpack.c.b16 %v1126, %v1120
    %v1499 = vpack.c.b16 %v1127, %v1121
    %v1500 = vpack.c.b16 %v1128, %v1122
    %v1501 = vpack.c.b16 %v1129, %v1123
    %v1502 = vpack.c.b16 %v1136, %v1130
    %v1503 = vpack.c.b16 %v1137, %v1131
    %v1504 = vpack.c.b16 %v1138, %v1132
    %v1505 = vpack.c.b16 %v1139, %v1133
    %v1506 = vpack.c.b16 %v1140, %v1134
    %v1507 = vpack.c.b16 %v1141, %v1135
    %v1508 = vpack.c.b16 %v1148, %v1142
    %v1509 = vpack.c.b16 %v1149, %v1143
    %v1510 = vpack.c.b16 %v1150, %v1144
    %v1511 = vpack.c.b16 %v1151, %v1145
    %v1512 = vpack.c.b16 %v1152, %v1146
    %v1513 = vpack.c.b16 %v1153, %v1147
    %v1514 = vpack.c.b16 %v1160, %v1154
    %v1515 = vpack.c.b16 %v1161, %v1155
    %v1516 = vpack.c.b16 %v1162, %v1156
    %v1517 = vpack.c.b16 %v1163, %v1157
    %v1518 = vpack.c.b16 %v1164, %v1158
    %v1519 = vpack.c.b16 %v1165, %v1159
    %v1520 = vpack.c.b16 %v1172, %v1166
    %v1521 = vpack.c.b16 %v1173, %v1167
    %v1522 = vpack.c.b16 %v1174, %v1168
    %v1523 = vpack.c.b16 %v1175, %v1169
    %v1524 = vpack.c.b16 %v1176, %v1170
    %v1525 = vpack.c.b16 %v1177, %v1171
    %v1526 = vpack.c.b16 %v1184, %v1178
    %v1527 = vpack.c.b16 %v1185, %v1179
    %v1528 = vpack.c.b16 %v1186, %v1180
    %v1529 = vpack.c.b16 %v1187, %v1181
    %v1530 = vpack.c.b16 %v1188, %v1182
    %v1531 = vpack.c.b16 %v1189, %v1183
    %v1532 = vpack.c.b16 %v1196, %v1190
    %v1533 = vpack.c.b16 %v1197, %v1191
    %v1534 = vpack.c.b16 %v1198, %v1192
    %v1535 = vpack.c.b16 %v1199, %v1193
    %v1536 = vpack.c.b16 %v1200, %v1194
    %v1537 = vpack.c.b16 %v1201, %v1195
    %v1538 = vpack.c.b16 %v1208, %v1202
    %v1539 = vpack.c.b16 %v1209, %v1203
    %v1540 = vpack.c.b16 %v1210, %v1204
    %v1541 = vpack.c.b16 %v1211, %v1205
    %v1542 = vpack.c.b16 %v1212, %v1206
    %v1543 = vpack.c.b16 %v1213, %v1207
    %v1544 = vpack.c.b16 %v1220, %v1214
    %v1545 = vpack.c.b16 %v1221, %v1215
    %v1546 = vpack.c.b16 %v1222, %v1216
    %v1547 = vpack.c.b16 %v1223, %v1217
    %v1548 = vpack.c.b16 %v1224, %v1218
    %v1549 = vpack.c.b16 %v1225, %v1219
    %v1550 = vpack.c.b16 %v1232, %v1226
    %v1551 = vpack.c.b16 %v1233, %v1227
    %v1552 = vpack.c.b16 %v1234, %v1228
    %v1553 = vpack.c.b16 %v1235, %v1229
    %v1554 = vpack.c.b16 %v1236, %v1230
    %v1555 = vpack.c.b16 %v1237, %v1231
    %v1556 = vpack.c.b16 %v1244, %v1238
    %v1557 = vpack.c.b16 %v1245, %v1239
    %v1558 = vpack.c.b16 %v1246, %v1240
    %v1559 = vpack.c.b16 %v1247, %v1241
    %v1560 = vpack.c.b16 %v1248, %v1242
    %v1561 = vpack.c.b16 %v1249, %v1243
    %v1562 = vpack.c.b16 %v1256, %v1250
    %v1563 = vpack.c.b16 %v1257, %v1251
    %v1564 = vpack.c.b16 %v1258, %v1252
    %v1565 = vpack.c.b16 %v1259, %v1253
    %v1566 = vpack.c.b16 %v1260, %v1254
    %v1567 = vpack.c.b16 %v1261, %v1255
    %v1568 = vpack.c.b16 %v1268, %v1262
    %v1569 = vpack.c.b16 %v1269, %v1263
    %v1570 = vpack.c.b16 %v1270, %v1264
    %v1571 = vpack.c.b16 %v1271, %v1265
    %v1572 = vpack.c.b16 %v1272, %v1266
    %v1573 = vpack.c.b16 %v1273, %v1267
    %v1574 = vpack.c.b16 %v1280, %v1274
    %v1575 = vpack.c.b16 %v1281, %v1275
    %v1576 = vpack.c.b16 %v1282, %v1276
    %v1577 = vpack.c.b16 %v1283, %v1277
    %v1578 = vpack.c.b16 %v1284, %v1278
    %v1579 = vpack.c.b16 %v1285, %v1279
    %v1580 = vpack.c.b16 %v1292, %v1286
    %v1581 = vpack.c.b16 %v1293, %v1287
    %v1582 = vpack.c.b16 %v1294, %v1288
    %v1583 = vpack.c.b16 %v1295, %v1289
    %v1584 = vpack.c.b16 %v1296, %v1290
    %v1585 = vpack.c.b16 %v1297, %v1291
    %1874 = vmatprep.subr.bf16.mxu0 %v1299
    %1875 = vmatpush1.bf16.msra.mxu0 %v1298
    %1876 = vmatprep.subr.bf16.mxu0 %v1305
    %1877 = vmatpush1.bf16.msra.mxu0 %v1304
    %1878 = vmatprep.subr.bf16.mxu0 %v1311
    %1879 = vmatpush1.bf16.msra.mxu0 %v1310
    %1880 = vmatprep.subr.bf16.mxu0 %v1317
    %1881 = vmatpush1.bf16.msra.mxu0 %v1316
    %1882 = vmatprep.subr.bf16.mxu0 %v1323
    %1883 = vmatpush1.bf16.msra.mxu0 %v1322
    %1884 = vmatprep.subr.bf16.mxu0 %v1329
    %1885 = vmatpush1.bf16.msra.mxu0 %v1328
    %1886 = vmatprep.subr.bf16.mxu0 %v1335
    %1887 = vmatpush1.bf16.msra.mxu0 %v1334
    %1888 = vmatprep.subr.bf16.mxu0 %v1341
    %1889 = vmatpush1.bf16.msra.mxu0 %v1340
    %1890 = vmatprep.subr.bf16.mxu0 %v1347
    %1891 = vmatpush1.bf16.msra.mxu0 %v1346
    %1892 = vmatprep.subr.bf16.mxu0 %v1353
    %1893 = vmatpush1.bf16.msra.mxu0 %v1352
    %1894 = vmatprep.subr.bf16.mxu0 %v1359
    %1895 = vmatpush1.bf16.msra.mxu0 %v1358
    %1896 = vmatprep.subr.bf16.mxu0 %v1365
    %1897 = vmatpush1.bf16.msra.mxu0 %v1364
    %1898 = vmatprep.subr.bf16.mxu0 %v1371
    %1899 = vmatpush1.bf16.msra.mxu0 %v1370
    %1900 = vmatprep.subr.bf16.mxu0 %v1377
    %1901 = vmatpush1.bf16.msra.mxu0 %v1376
    %1902 = vmatprep.subr.bf16.mxu0 %v1383
    %1903 = vmatpush1.bf16.msra.mxu0 %v1382
    %1904 = vmatprep.subr.bf16.mxu0 %v1389
    %1905 = vmatpush1.bf16.msra.mxu0 %v1388
    %1906 = vmatprep.mubr.bf16.mxu0 %v411
    %1907 = vmatmul.mubr.bf16.gmra.mrb[0].mxu0 %v410
    %v1908 = vpop.f32.mrb[0].mxu0
    %v1909 = vadd.f32 %v356, %v1908
    %v1910 = vpop.f32.mrb[0].mxu0
    %v1911 = vadd.f32 %v360, %v1910
    %v1912 = vpop.f32.mrb[0].mxu0
    %v1913 = vadd.f32 %v356, %v1912
    %v1914 = vpop.f32.mrb[0].mxu0
    %v1915 = vadd.f32 %v360, %v1914
    %1916 = vmatprep.mubr.bf16.mxu0 %v417
    %1917 = vmatmul.mubr.bf16.gmra.mrb[0].mxu0 %v416
    %v1918 = vpop.f32.mrb[0].mxu0
    %v1919 = vadd.f32 %v356, %v1918
    %v1920 = vpop.f32.mrb[0].mxu0
    %v1921 = vadd.f32 %v360, %v1920
    %v1922 = vpop.f32.mrb[0].mxu0
    %v1923 = vpop.f32.mrb[0].mxu0
    %1924 = vdwg.mxu0
    %1925 = vmatprep.subr.bf16.mxu0 %v1395
    %1926 = vmatpush1.bf16.msra.mxu0 %v1394
    %1927 = vmatprep.subr.bf16.mxu0 %v1401
    %1928 = vmatpush1.bf16.msra.mxu0 %v1400
    %1929 = vmatprep.subr.bf16.mxu0 %v1407
    %1930 = vmatpush1.bf16.msra.mxu0 %v1406
    %1931 = vmatprep.subr.bf16.mxu0 %v1413
    %1932 = vmatpush1.bf16.msra.mxu0 %v1412
    %1933 = vmatprep.subr.bf16.mxu0 %v1419
    %1934 = vmatpush1.bf16.msra.mxu0 %v1418
    %1935 = vmatprep.subr.bf16.mxu0 %v1425
    %1936 = vmatpush1.bf16.msra.mxu0 %v1424
    %1937 = vmatprep.subr.bf16.mxu0 %v1431
    %1938 = vmatpush1.bf16.msra.mxu0 %v1430
    %1939 = vmatprep.subr.bf16.mxu0 %v1437
    %1940 = vmatpush1.bf16.msra.mxu0 %v1436
    %1941 = vmatprep.subr.bf16.mxu0 %v1443
    %1942 = vmatpush1.bf16.msra.mxu0 %v1442
    %1943 = vmatprep.subr.bf16.mxu0 %v1449
    %1944 = vmatpush1.bf16.msra.mxu0 %v1448
    %1945 = vmatprep.subr.bf16.mxu0 %v1455
    %1946 = vmatpush1.bf16.msra.mxu0 %v1454
    %1947 = vmatprep.subr.bf16.mxu0 %v1461
    %1948 = vmatpush1.bf16.msra.mxu0 %v1460
    %1949 = vmatprep.subr.bf16.mxu0 %v1467
    %1950 = vmatpush1.bf16.msra.mxu0 %v1466
    %1951 = vmatprep.subr.bf16.mxu0 %v1473
    %1952 = vmatpush1.bf16.msra.mxu0 %v1472
    %1953 = vmatprep.subr.bf16.mxu0 %v1479
    %1954 = vmatpush1.bf16.msra.mxu0 %v1478
    %1955 = vmatprep.subr.bf16.mxu0 %v1485
    %1956 = vmatpush1.bf16.msra.mxu0 %v1484
    %1957 = vmatprep.mubr.bf16.mxu0 %v413
    %1958 = vmatmul.mubr.bf16.gmra.mrb[0].mxu0 %v412
    %v1959 = vpop.f32.mrb[0].mxu0
    %v1960 = vadd.f32 %v1909, %v1959
    %v1961 = vpop.f32.mrb[0].mxu0
    %v1962 = vadd.f32 %v1911, %v1961
    %v1963 = vpop.f32.mrb[0].mxu0
    %v1964 = vadd.f32 %v1913, %v1963
    %v1965 = vpop.f32.mrb[0].mxu0
    %v1966 = vadd.f32 %v1915, %v1965
    %1967 = vmatprep.mubr.bf16.mxu0 %v419
    %1968 = vmatmul.mubr.bf16.gmra.mrb[0].mxu0 %v418
    %v1969 = vpop.f32.mrb[0].mxu0
    %v1970 = vadd.f32 %v1919, %v1969
    %v1971 = vpop.f32.mrb[0].mxu0
    %v1972 = vadd.f32 %v1921, %v1971
    %v1973 = vpop.f32.mrb[0].mxu0
    %v1974 = vpop.f32.mrb[0].mxu0
    %1975 = vdwg.mxu0
    %1976 = vmatprep.subr.bf16.mxu0 %v1491
    %1977 = vmatpush1.bf16.msra.mxu0 %v1490
    %1978 = vmatprep.subr.bf16.mxu0 %v1497
    %1979 = vmatpush1.bf16.msra.mxu0 %v1496
    %1980 = vmatprep.subr.bf16.mxu0 %v1503
    %1981 = vmatpush1.bf16.msra.mxu0 %v1502
    %1982 = vmatprep.subr.bf16.mxu0 %v1509
    %1983 = vmatpush1.bf16.msra.mxu0 %v1508
    %1984 = vmatprep.subr.bf16.mxu0 %v1515
    %1985 = vmatpush1.bf16.msra.mxu0 %v1514
    %1986 = vmatprep.subr.bf16.mxu0 %v1521
    %1987 = vmatpush1.bf16.msra.mxu0 %v1520
    %1988 = vmatprep.subr.bf16.mxu0 %v1527
    %1989 = vmatpush1.bf16.msra.mxu0 %v1526
    %1990 = vmatprep.subr.bf16.mxu0 %v1533
    %1991 = vmatpush1.bf16.msra.mxu0 %v1532
    %1992 = vmatprep.subr.bf16.mxu0 %v1539
    %1993 = vmatpush1.bf16.msra.mxu0 %v1538
    %1994 = vmatprep.subr.bf16.mxu0 %v1545
    %1995 = vmatpush1.bf16.msra.mxu0 %v1544
    %1996 = vmatprep.subr.bf16.mxu0 %v1551
    %1997 = vmatpush1.bf16.msra.mxu0 %v1550
    %1998 = vmatprep.subr.bf16.mxu0 %v1557
    %1999 = vmatpush1.bf16.msra.mxu0 %v1556
    %2000 = vmatprep.subr.bf16.mxu0 %v1563
    %2001 = vmatpush1.bf16.msra.mxu0 %v1562
    %2002 = vmatprep.subr.bf16.mxu0 %v1569
    %2003 = vmatpush1.bf16.msra.mxu0 %v1568
    %2004 = vmatprep.subr.bf16.mxu0 %v1575
    %2005 = vmatpush1.bf16.msra.mxu0 %v1574
    %2006 = vmatprep.subr.bf16.mxu0 %v1581
    %2007 = vmatpush1.bf16.msra.mxu0 %v1580
    %2008 = vmatprep.mubr.bf16.mxu0 %v415
    %2009 = vmatmul.mubr.bf16.gmra.mrb[0].mxu0 %v414
    %v2010 = vpop.f32.mrb[0].mxu0
    %v2011 = vadd.f32 %v1960, %v2010
    %v2012 = vpop.f32.mrb[0].mxu0
    %v2013 = vadd.f32 %v1962, %v2012
    %v2014 = vpop.f32.mrb[0].mxu0
    %v2015 = vadd.f32 %v1964, %v2014
    %v2016 = vpop.f32.mrb[0].mxu0
    %v2017 = vadd.f32 %v1966, %v2016
    %2018 = vmatprep.mubr.bf16.mxu0 %v421
    %2019 = vmatmul.mubr.bf16.gmra.mrb[0].mxu0 %v420
    %v2020 = vpop.f32.mrb[0].mxu0
    %v2021 = vadd.f32 %v1970, %v2020
    %v2022 = vpop.f32.mrb[0].mxu0
    %v2023 = vadd.f32 %v1972, %v2022
    %v2024 = vpop.f32.mrb[0].mxu0
    %v2025 = vpop.f32.mrb[0].mxu0
    %2026 = vdwg.mxu0
    %2027 = vmatprep.subr.bf16.mxu0 %v1301
    %2028 = vmatpush1.bf16.msra.mxu0 %v1300
    %2029 = vmatprep.subr.bf16.mxu0 %v1307
    %2030 = vmatpush1.bf16.msra.mxu0 %v1306
    %2031 = vmatprep.subr.bf16.mxu0 %v1313
    %2032 = vmatpush1.bf16.msra.mxu0 %v1312
    %2033 = vmatprep.subr.bf16.mxu0 %v1319
    %2034 = vmatpush1.bf16.msra.mxu0 %v1318
    %2035 = vmatprep.subr.bf16.mxu0 %v1325
    %2036 = vmatpush1.bf16.msra.mxu0 %v1324
    %2037 = vmatprep.subr.bf16.mxu0 %v1331
    %2038 = vmatpush1.bf16.msra.mxu0 %v1330
    %2039 = vmatprep.subr.bf16.mxu0 %v1337
    %2040 = vmatpush1.bf16.msra.mxu0 %v1336
    %2041 = vmatprep.subr.bf16.mxu0 %v1343
    %2042 = vmatpush1.bf16.msra.mxu0 %v1342
    %2043 = vmatprep.subr.bf16.mxu0 %v1349
    %2044 = vmatpush1.bf16.msra.mxu0 %v1348
    %2045 = vmatprep.subr.bf16.mxu0 %v1355
    %2046 = vmatpush1.bf16.msra.mxu0 %v1354
    %2047 = vmatprep.subr.bf16.mxu0 %v1361
    %2048 = vmatpush1.bf16.msra.mxu0 %v1360
    %2049 = vmatprep.subr.bf16.mxu0 %v1367
    %2050 = vmatpush1.bf16.msra.mxu0 %v1366
    %2051 = vmatprep.subr.bf16.mxu0 %v1373
    %2052 = vmatpush1.bf16.msra.mxu0 %v1372
    %2053 = vmatprep.subr.bf16.mxu0 %v1379
    %2054 = vmatpush1.bf16.msra.mxu0 %v1378
    %2055 = vmatprep.subr.bf16.mxu0 %v1385
    %2056 = vmatpush1.bf16.msra.mxu0 %v1384
    %2057 = vmatprep.subr.bf16.mxu0 %v1391
    %2058 = vmatpush1.bf16.msra.mxu0 %v1390
    %2059 = vmatprep.mubr.bf16.mxu0 %v411
    %2060 = vmatmul.mubr.bf16.gmra.mrb[0].mxu0 %v410
    %v2061 = vpop.f32.mrb[0].mxu0
    %v2062 = vadd.f32 %v364, %v2061
    %v2063 = vpop.f32.mrb[0].mxu0
    %v2064 = vadd.f32 %v368, %v2063
    %v2065 = vpop.f32.mrb[0].mxu0
    %v2066 = vadd.f32 %v364, %v2065
    %v2067 = vpop.f32.mrb[0].mxu0
    %v2068 = vadd.f32 %v368, %v2067
    %2069 = vmatprep.mubr.bf16.mxu0 %v417
    %2070 = vmatmul.mubr.bf16.gmra.mrb[0].mxu0 %v416
    %v2071 = vpop.f32.mrb[0].mxu0
    %v2072 = vadd.f32 %v364, %v2071
    %v2073 = vpop.f32.mrb[0].mxu0
    %v2074 = vadd.f32 %v368, %v2073
    %v2075 = vpop.f32.mrb[0].mxu0
    %v2076 = vpop.f32.mrb[0].mxu0
    %2077 = vdwg.mxu0
    %2078 = vmatprep.subr.bf16.mxu0 %v1397
    %2079 = vmatpush1.bf16.msra.mxu0 %v1396
    %2080 = vmatprep.subr.bf16.mxu0 %v1403
    %2081 = vmatpush1.bf16.msra.mxu0 %v1402
    %2082 = vmatprep.subr.bf16.mxu0 %v1409
    %2083 = vmatpush1.bf16.msra.mxu0 %v1408
    %2084 = vmatprep.subr.bf16.mxu0 %v1415
    %2085 = vmatpush1.bf16.msra.mxu0 %v1414
    %2086 = vmatprep.subr.bf16.mxu0 %v1421
    %2087 = vmatpush1.bf16.msra.mxu0 %v1420
    %2088 = vmatprep.subr.bf16.mxu0 %v1427
    %2089 = vmatpush1.bf16.msra.mxu0 %v1426
    %2090 = vmatprep.subr.bf16.mxu0 %v1433
    %2091 = vmatpush1.bf16.msra.mxu0 %v1432
    %2092 = vmatprep.subr.bf16.mxu0 %v1439
    %2093 = vmatpush1.bf16.msra.mxu0 %v1438
    %2094 = vmatprep.subr.bf16.mxu0 %v1445
    %2095 = vmatpush1.bf16.msra.mxu0 %v1444
    %2096 = vmatprep.subr.bf16.mxu0 %v1451
    %2097 = vmatpush1.bf16.msra.mxu0 %v1450
    %2098 = vmatprep.subr.bf16.mxu0 %v1457
    %2099 = vmatpush1.bf16.msra.mxu0 %v1456
    %2100 = vmatprep.subr.bf16.mxu0 %v1463
    %2101 = vmatpush1.bf16.msra.mxu0 %v1462
    %2102 = vmatprep.subr.bf16.mxu0 %v1469
    %2103 = vmatpush1.bf16.msra.mxu0 %v1468
    %2104 = vmatprep.subr.bf16.mxu0 %v1475
    %2105 = vmatpush1.bf16.msra.mxu0 %v1474
    %2106 = vmatprep.subr.bf16.mxu0 %v1481
    %2107 = vmatpush1.bf16.msra.mxu0 %v1480
    %2108 = vmatprep.subr.bf16.mxu0 %v1487
    %2109 = vmatpush1.bf16.msra.mxu0 %v1486
    %2110 = vmatprep.mubr.bf16.mxu0 %v413
    %2111 = vmatmul.mubr.bf16.gmra.mrb[0].mxu0 %v412
    %v2112 = vpop.f32.mrb[0].mxu0
    %v2113 = vadd.f32 %v2062, %v2112
    %v2114 = vpop.f32.mrb[0].mxu0
    %v2115 = vadd.f32 %v2064, %v2114
    %v2116 = vpop.f32.mrb[0].mxu0
    %v2117 = vadd.f32 %v2066, %v2116
    %v2118 = vpop.f32.mrb[0].mxu0
    %v2119 = vadd.f32 %v2068, %v2118
    %2120 = vmatprep.mubr.bf16.mxu0 %v419
    %2121 = vmatmul.mubr.bf16.gmra.mrb[0].mxu0 %v418
    %v2122 = vpop.f32.mrb[0].mxu0
    %v2123 = vadd.f32 %v2072, %v2122
    %v2124 = vpop.f32.mrb[0].mxu0
    %v2125 = vadd.f32 %v2074, %v2124
    %v2126 = vpop.f32.mrb[0].mxu0
    %v2127 = vpop.f32.mrb[0].mxu0
    %2128 = vdwg.mxu0
    %2129 = vmatprep.subr.bf16.mxu0 %v1493
    %2130 = vmatpush1.bf16.msra.mxu0 %v1492
    %2131 = vmatprep.subr.bf16.mxu0 %v1499
    %2132 = vmatpush1.bf16.msra.mxu0 %v1498
    %2133 = vmatprep.subr.bf16.mxu0 %v1505
    %2134 = vmatpush1.bf16.msra.mxu0 %v1504
    %2135 = vmatprep.subr.bf16.mxu0 %v1511
    %2136 = vmatpush1.bf16.msra.mxu0 %v1510
    %2137 = vmatprep.subr.bf16.mxu0 %v1517
    %2138 = vmatpush1.bf16.msra.mxu0 %v1516
    %2139 = vmatprep.subr.bf16.mxu0 %v1523
    %2140 = vmatpush1.bf16.msra.mxu0 %v1522
    %2141 = vmatprep.subr.bf16.mxu0 %v1529
    %2142 = vmatpush1.bf16.msra.mxu0 %v1528
    %2143 = vmatprep.subr.bf16.mxu0 %v1535
    %2144 = vmatpush1.bf16.msra.mxu0 %v1534
    %2145 = vmatprep.subr.bf16.mxu0 %v1541
    %2146 = vmatpush1.bf16.msra.mxu0 %v1540
    %2147 = vmatprep.subr.bf16.mxu0 %v1547
    %2148 = vmatpush1.bf16.msra.mxu0 %v1546
    %2149 = vmatprep.subr.bf16.mxu0 %v1553
    %2150 = vmatpush1.bf16.msra.mxu0 %v1552
    %2151 = vmatprep.subr.bf16.mxu0 %v1559
    %2152 = vmatpush1.bf16.msra.mxu0 %v1558
    %2153 = vmatprep.subr.bf16.mxu0 %v1565
    %2154 = vmatpush1.bf16.msra.mxu0 %v1564
    %2155 = vmatprep.subr.bf16.mxu0 %v1571
    %2156 = vmatpush1.bf16.msra.mxu0 %v1570
    %2157 = vmatprep.subr.bf16.mxu0 %v1577
    %2158 = vmatpush1.bf16.msra.mxu0 %v1576
    %2159 = vmatprep.subr.bf16.mxu0 %v1583
    %2160 = vmatpush1.bf16.msra.mxu0 %v1582
    %2161 = vmatprep.mubr.bf16.mxu0 %v415
    %2162 = vmatmul.mubr.bf16.gmra.mrb[0].mxu0 %v414
    %v2163 = vpop.f32.mrb[0].mxu0
    %v2164 = vadd.f32 %v2113, %v2163
    %v2165 = vpop.f32.mrb[0].mxu0
    %v2166 = vadd.f32 %v2115, %v2165
    %v2167 = vpop.f32.mrb[0].mxu0
    %v2168 = vadd.f32 %v2117, %v2167
    %v2169 = vpop.f32.mrb[0].mxu0
    %v2170 = vadd.f32 %v2119, %v2169
    %2171 = vmatprep.mubr.bf16.mxu0 %v421
    %2172 = vmatmul.mubr.bf16.gmra.mrb[0].mxu0 %v420
    %v2173 = vpop.f32.mrb[0].mxu0
    %v2174 = vadd.f32 %v2123, %v2173
    %v2175 = vpop.f32.mrb[0].mxu0
    %v2176 = vadd.f32 %v2125, %v2175
    %v2177 = vpop.f32.mrb[0].mxu0
    %v2178 = vpop.f32.mrb[0].mxu0
    %2179 = vdwg.mxu0
    %2180 = vmatprep.subr.bf16.mxu0 %v1303
    %2181 = vmatpush1.bf16.msra.mxu0 %v1302
    %2182 = vmatprep.subr.bf16.mxu0 %v1309
    %2183 = vmatpush1.bf16.msra.mxu0 %v1308
    %2184 = vmatprep.subr.bf16.mxu0 %v1315
    %2185 = vmatpush1.bf16.msra.mxu0 %v1314
    %2186 = vmatprep.subr.bf16.mxu0 %v1321
    %2187 = vmatpush1.bf16.msra.mxu0 %v1320
    %2188 = vmatprep.subr.bf16.mxu0 %v1327
    %2189 = vmatpush1.bf16.msra.mxu0 %v1326
    %2190 = vmatprep.subr.bf16.mxu0 %v1333
    %2191 = vmatpush1.bf16.msra.mxu0 %v1332
    %2192 = vmatprep.subr.bf16.mxu0 %v1339
    %2193 = vmatpush1.bf16.msra.mxu0 %v1338
    %2194 = vmatprep.subr.bf16.mxu0 %v1345
    %2195 = vmatpush1.bf16.msra.mxu0 %v1344
    %2196 = vmatprep.subr.bf16.mxu0 %v1351
    %2197 = vmatpush1.bf16.msra.mxu0 %v1350
    %2198 = vmatprep.subr.bf16.mxu0 %v1357
    %2199 = vmatpush1.bf16.msra.mxu0 %v1356
    %2200 = vmatprep.subr.bf16.mxu0 %v1363
    %2201 = vmatpush1.bf16.msra.mxu0 %v1362
    %2202 = vmatprep.subr.bf16.mxu0 %v1369
    %2203 = vmatpush1.bf16.msra.mxu0 %v1368
    %2204 = vmatprep.subr.bf16.mxu0 %v1375
    %2205 = vmatpush1.bf16.msra.mxu0 %v1374
    %2206 = vmatprep.subr.bf16.mxu0 %v1381
    %2207 = vmatpush1.bf16.msra.mxu0 %v1380
    %2208 = vmatprep.subr.bf16.mxu0 %v1387
    %2209 = vmatpush1.bf16.msra.mxu0 %v1386
    %2210 = vmatprep.subr.bf16.mxu0 %v1393
    %2211 = vmatpush1.bf16.msra.mxu0 %v1392
    %2212 = vmatprep.mubr.bf16.mxu0 %v411
    %2213 = vmatmul.mubr.bf16.gmra.mrb[0].mxu0 %v410
    %v2214 = vpop.f32.mrb[0].mxu0
    %v2215 = vadd.f32 %v372, %v2214
    %v2216 = vpop.f32.mrb[0].mxu0
    %v2217 = vadd.f32 %v376, %v2216
    %v2218 = vpop.f32.mrb[0].mxu0
    %v2219 = vadd.f32 %v372, %v2218
    %v2220 = vpop.f32.mrb[0].mxu0
    %v2221 = vadd.f32 %v376, %v2220
    %2222 = vmatprep.mubr.bf16.mxu0 %v417
    %2223 = vmatmul.mubr.bf16.gmra.mrb[0].mxu0 %v416
    %v2224 = vpop.f32.mrb[0].mxu0
    %v2225 = vadd.f32 %v372, %v2224
    %v2226 = vpop.f32.mrb[0].mxu0
    %v2227 = vadd.f32 %v376, %v2226
    %v2228 = vpop.f32.mrb[0].mxu0
    %v2229 = vpop.f32.mrb[0].mxu0
    %2230 = vdwg.mxu0
    %2231 = vmatprep.subr.bf16.mxu0 %v1399
    %2232 = vmatpush1.bf16.msra.mxu0 %v1398
    %2233 = vmatprep.subr.bf16.mxu0 %v1405
    %2234 = vmatpush1.bf16.msra.mxu0 %v1404
    %2235 = vmatprep.subr.bf16.mxu0 %v1411
    %2236 = vmatpush1.bf16.msra.mxu0 %v1410
    %2237 = vmatprep.subr.bf16.mxu0 %v1417
    %2238 = vmatpush1.bf16.msra.mxu0 %v1416
    %2239 = vmatprep.subr.bf16.mxu0 %v1423
    %2240 = vmatpush1.bf16.msra.mxu0 %v1422
    %2241 = vmatprep.subr.bf16.mxu0 %v1429
    %2242 = vmatpush1.bf16.msra.mxu0 %v1428
    %2243 = vmatprep.subr.bf16.mxu0 %v1435
    %2244 = vmatpush1.bf16.msra.mxu0 %v1434
    %2245 = vmatprep.subr.bf16.mxu0 %v1441
    %2246 = vmatpush1.bf16.msra.mxu0 %v1440
    %2247 = vmatprep.subr.bf16.mxu0 %v1447
    %2248 = vmatpush1.bf16.msra.mxu0 %v1446
    %2249 = vmatprep.subr.bf16.mxu0 %v1453
    %2250 = vmatpush1.bf16.msra.mxu0 %v1452
    %2251 = vmatprep.subr.bf16.mxu0 %v1459
    %2252 = vmatpush1.bf16.msra.mxu0 %v1458
    %2253 = vmatprep.subr.bf16.mxu0 %v1465
    %2254 = vmatpush1.bf16.msra.mxu0 %v1464
    %2255 = vmatprep.subr.bf16.mxu0 %v1471
    %2256 = vmatpush1.bf16.msra.mxu0 %v1470
    %2257 = vmatprep.subr.bf16.mxu0 %v1477
    %2258 = vmatpush1.bf16.msra.mxu0 %v1476
    %2259 = vmatprep.subr.bf16.mxu0 %v1483
    %2260 = vmatpush1.bf16.msra.mxu0 %v1482
    %2261 = vmatprep.subr.bf16.mxu0 %v1489
    %2262 = vmatpush1.bf16.msra.mxu0 %v1488
    %2263 = vmatprep.mubr.bf16.mxu0 %v413
    %2264 = vmatmul.mubr.bf16.gmra.mrb[0].mxu0 %v412
    %v2265 = vpop.f32.mrb[0].mxu0
    %v2266 = vadd.f32 %v2215, %v2265
    %v2267 = vpop.f32.mrb[0].mxu0
    %v2268 = vadd.f32 %v2217, %v2267
    %v2269 = vpop.f32.mrb[0].mxu0
    %v2270 = vadd.f32 %v2219, %v2269
    %v2271 = vpop.f32.mrb[0].mxu0
    %v2272 = vadd.f32 %v2221, %v2271
    %2273 = vmatprep.mubr.bf16.mxu0 %v419
    %2274 = vmatmul.mubr.bf16.gmra.mrb[0].mxu0 %v418
    %v2275 = vpop.f32.mrb[0].mxu0
    %v2276 = vadd.f32 %v2225, %v2275
    %v2277 = vpop.f32.mrb[0].mxu0
    %v2278 = vadd.f32 %v2227, %v2277
    %v2279 = vpop.f32.mrb[0].mxu0
    %v2280 = vpop.f32.mrb[0].mxu0
    %2281 = vdwg.mxu0
    %2282 = vmatprep.subr.bf16.mxu0 %v1495
    %2283 = vmatpush1.bf16.msra.mxu0 %v1494
    %2284 = vmatprep.subr.bf16.mxu0 %v1501
    %2285 = vmatpush1.bf16.msra.mxu0 %v1500
    %2286 = vmatprep.subr.bf16.mxu0 %v1507
    %2287 = vmatpush1.bf16.msra.mxu0 %v1506
    %2288 = vmatprep.subr.bf16.mxu0 %v1513
    %2289 = vmatpush1.bf16.msra.mxu0 %v1512
    %2290 = vmatprep.subr.bf16.mxu0 %v1519
    %2291 = vmatpush1.bf16.msra.mxu0 %v1518
    %2292 = vmatprep.subr.bf16.mxu0 %v1525
    %2293 = vmatpush1.bf16.msra.mxu0 %v1524
    %2294 = vmatprep.subr.bf16.mxu0 %v1531
    %2295 = vmatpush1.bf16.msra.mxu0 %v1530
    %2296 = vmatprep.subr.bf16.mxu0 %v1537
    %2297 = vmatpush1.bf16.msra.mxu0 %v1536
    %2298 = vmatprep.subr.bf16.mxu0 %v1543
    %2299 = vmatpush1.bf16.msra.mxu0 %v1542
    %2300 = vmatprep.subr.bf16.mxu0 %v1549
    %2301 = vmatpush1.bf16.msra.mxu0 %v1548
    %2302 = vmatprep.subr.bf16.mxu0 %v1555
    %2303 = vmatpush1.bf16.msra.mxu0 %v1554
    %2304 = vmatprep.subr.bf16.mxu0 %v1561
    %2305 = vmatpush1.bf16.msra.mxu0 %v1560
    %2306 = vmatprep.subr.bf16.mxu0 %v1567
    %2307 = vmatpush1.bf16.msra.mxu0 %v1566
    %2308 = vmatprep.subr.bf16.mxu0 %v1573
    %2309 = vmatpush1.bf16.msra.mxu0 %v1572
    %2310 = vmatprep.subr.bf16.mxu0 %v1579
    %2311 = vmatpush1.bf16.msra.mxu0 %v1578
    %2312 = vmatprep.subr.bf16.mxu0 %v1585
    %2313 = vmatpush1.bf16.msra.mxu0 %v1584
    %2314 = vmatprep.mubr.bf16.mxu0 %v415
    %2315 = vmatmul.mubr.bf16.gmra.mrb[0].mxu0 %v414
    %v2316 = vpop.f32.mrb[0].mxu0
    %v2317 = vadd.f32 %v2266, %v2316
    %v2318 = vpop.f32.mrb[0].mxu0
    %v2319 = vadd.f32 %v2268, %v2318
    %v2320 = vpop.f32.mrb[0].mxu0
    %v2321 = vadd.f32 %v2270, %v2320
    %v2322 = vpop.f32.mrb[0].mxu0
    %v2323 = vadd.f32 %v2272, %v2322
    %2324 = vmatprep.mubr.bf16.mxu0 %v421
    %2325 = vmatmul.mubr.bf16.gmra.mrb[0].mxu0 %v420
    %v2326 = vpop.f32.mrb[0].mxu0
    %v2327 = vadd.f32 %v2276, %v2326
    %v2328 = vpop.f32.mrb[0].mxu0
    %v2329 = vadd.f32 %v2278, %v2328
    %v2330 = vpop.f32.mrb[0].mxu0
    %v2331 = vpop.f32.mrb[0].mxu0
    %2332 = vdwg.mxu0
    %v2333 = vmax.f32 %v2011, 0.0
    %v2334 = vmax.f32 %v2013, 0.0
    %v2335 = vmax.f32 %v2164, 0.0
    %v2336 = vmax.f32 %v2166, 0.0
    %v2337 = vmax.f32 %v2317, 0.0
    %v2338 = vmax.f32 %v2319, 0.0
    %v2339 = vmax.f32 %v2015, 0.0
    %v2340 = vmax.f32 %v2017, 0.0
    %v2341 = vmax.f32 %v2168, 0.0
    %v2342 = vmax.f32 %v2170, 0.0
    %v2343 = vmax.f32 %v2321, 0.0
    %v2344 = vmax.f32 %v2323, 0.0
    %v2345 = vmax.f32 %v2021, 0.0
    %v2346 = vmax.f32 %v2023, 0.0
    %v2347 = vmax.f32 %v2174, 0.0
    %v2348 = vmax.f32 %v2176, 0.0
    %v2349 = vmax.f32 %v2327, 0.0
    %v2350 = vmax.f32 %v2329, 0.0
    %2351 = vst [vmem:[#allocation8] sm:$0xff] %v2333
    %2352 = vst [vmem:[#allocation8 + $0x8] sm:$0xff] %v2334
    %2353 = vst [vmem:[#allocation8 + $0x10] sm:$0xff] %v2335
    %2354 = vst [vmem:[#allocation8 + $0x18] sm:$0xff] %v2336
    %2355 = vst [vmem:[#allocation8 + $0x20] sm:$0xff] %v2337
    %2356 = vst [vmem:[#allocation8 + $0x28] sm:$0xff] %v2338
    %2357 = vst [vmem:[#allocation8 + $0x30] sm:$0xff] %v2339
    %2358 = vst [vmem:[#allocation8 + $0x38] sm:$0xff] %v2340
    %2359 = vst [vmem:[#allocation8 + $0x40] sm:$0xff] %v2341
    %2360 = vst [vmem:[#allocation8 + $0x48] sm:$0xff] %v2342
    %2361 = vst [vmem:[#allocation8 + $0x50] sm:$0xff] %v2343
    %2362 = vst [vmem:[#allocation8 + $0x58] sm:$0xff] %v2344
    %2363 = vst [vmem:[#allocation8 + $0x60] sm:$0xff] %v2345
    %2364 = vst [vmem:[#allocation8 + $0x68] sm:$0xff] %v2346
    %2365 = vst [vmem:[#allocation8 + $0x70] sm:$0xff] %v2347
    %2366 = vst [vmem:[#allocation8 + $0x78] sm:$0xff] %v2348
    %2367 = vst [vmem:[#allocation8 + $0x80] sm:$0xff] %v2349
    %2368 = vst [vmem:[#allocation8 + $0x88] sm:$0xff] %v2350
    // Predicated region
    $region26: #{tpu_custom_call.1} parent=1 // pred_check
      _
    $region27: #{tpu_custom_call.1} parent=1 // pred_check_branch
      %2370 = sbr.rel (0) target = $region29
    $region28: #{tpu_custom_call.1} parent=1 // pred_region
      %s2372 = ssub.s32 2304, 2304
      %2373 = vsyncadd [#allocation4], %s2372
      %s2374 = sshll.u32 [#allocation8], 4
      %s2375 = int_to_ptr.vmem [resolvable:$true] %s2374
      %2380 = dma.vmem_to_hbm [thread:$0]  %s2375, 2304, %s3, [#allocation4], 768, 768, 48
    $region29: #{tpu_custom_call.1} parent=1 // pred_fallthru
      _
    // Predicated region
    $region30: #{tpu_custom_call.1} parent=1 // pred_check
      _
    $region31: #{tpu_custom_call.1} parent=1 // pred_check_branch
      %2382 = sbr.rel (0) target = $region33
    $region32: #{tpu_custom_call.1} parent=1 // pred_region
      %2383 = dma.done [#allocation4], 2304
    $region33: #{tpu_custom_call.1} parent=1 // pred_fallthru
      _
    %2384 = vsyncpa [#allocation3], 1
    %2385 = vsyncpa [#allocation6], 1
    %2386 = vsyncpa [#allocation4], 1

</llo_original>
